<compile_context>
chip_gen: v6e
topology: v6e:2x2x1
jax: 0.10.0
libtpu: 0.0.40
codegen_flags: <defaults>
</compile_context>

<pallas_src>
import jax
import jax.numpy as jnp
from jax.experimental import pallas as pl
from jax.experimental.pallas import tpu as pltpu


def _mixtral_mlp_kernel(x_ref, w1_ref, w3_ref, w2_ref, o_ref, acc_ref):
    """One (token-tile i, ffn-tile k) grid step of (SiLU(x@w1) * (x@w3)) @ w2."""
    k = pl.program_id(1)

    @pl.when(k == 0)
    def _():
        acc_ref[...] = jnp.zeros_like(acc_ref)

    x = x_ref[...]                                                      # (tm, H)
    h1 = jnp.dot(x, w1_ref[...], preferred_element_type=jnp.float32)   # (tm, tf) f32
    h3 = jnp.dot(x, w3_ref[...], preferred_element_type=jnp.float32)   # (tm, tf) f32
    # SiLU(h1) = h1 * sigmoid(h1); exp + approx reciprocal run on the EUP slot.
    gate = h1 * pl.reciprocal(1.0 + jnp.exp(-h1), approx=True)
    g = (gate * h3).astype(w2_ref.dtype)                                # (tm, tf)
    acc_ref[...] += jnp.dot(g, w2_ref[...], preferred_element_type=jnp.float32)

    @pl.when(k == pl.num_programs(1) - 1)
    def _():
        o_ref[...] = acc_ref[...].astype(o_ref.dtype)


def _round_up(a, b):
    return (a + b - 1) // b * b


def _vmem_capacity_bytes(default=64 << 20):
    """Per-core VMEM capacity; conservative (v7x-sized) fallback if the query fails."""
    try:
        info = pltpu.get_tpu_info()
        cap = getattr(info, "vmem_capacity_bytes", None)
        if cap:
            return int(cap)
    except Exception:
        pass
    return default


def mixtral_mlp(x, w1, w3, w2, *, tm=None, tf=None):
    """out = (SiLU(x @ w1) * (x @ w3)) @ w2 with f32 accumulation.

    x: [T, H]; w1, w3: [H, F]; w2: [F, H].  Returns [T, H] in x.dtype.
    """
    T, H = x.shape
    Hw, F = w1.shape
    assert Hw == H and w3.shape == (H, F) and w2.shape == (F, H)

    vmem_cap = _vmem_capacity_bytes()
    small_vmem = vmem_cap <= (64 << 20)       # v7x: 64 MiB/TC; v5e/v6e: 128 MiB

    # Generation-aware defaults. Arithmetic intensity on the weight stream == tm
    # (weights are re-streamed T/tm times), so tm=512 clears the roofline crossover
    # on v5e (~240), v7x (~310) and gets close on v6e (~650).
    if tm is None:
        tm = 512
    if tf is None:
        tf = 256 if small_vmem else 512

    # Token axis: pad to the sublane packing unit; pick a tile that divides padded T.
    sub = 16 if x.dtype == jnp.bfloat16 else 8
    tm = _round_up(max(sub, min(tm, _round_up(T, sub))), sub)
    Tp = _round_up(T, tm)
    if Tp != T:
        x = jnp.pad(x, ((0, Tp - T), (0, 0)))

    # FFN axis: 128-aligned tile that divides F.
    tf = min(tf, F)
    while tf > 128 and F % tf != 0:
        tf -= 128
    assert tf % 128 == 0 and F % tf == 0, (F, tf)

    n_i, n_k = Tp // tm, F // tf
    grid = (n_i, n_k)

    # Decode (single token tile): weight DMA is the whole critical path -> 3-deep
    # buffering on the weight streams to smooth per-step DMA jitter.
    decode = n_i == 1
    if decode and n_k >= 3:
        wbufs = 3
        wspec = lambda shape, imap: pl.BlockSpec(shape, imap, pipeline_mode=pl.Buffered(3))
    else:
        wbufs = 2
        wspec = lambda shape, imap: pl.BlockSpec(shape, imap)
    # TODO(synk): for v7x decode, additionally split F over a leading size-2 "parallel"
    # grid axis (two partial (tm, H) outputs summed by XLA) to engage both TensorCores.

    in_specs = [
        pl.BlockSpec((tm, H), lambda i, k: (i, 0)),      # x
        wspec((H, tf), lambda i, k: (0, k)),             # w1
        wspec((H, tf), lambda i, k: (0, k)),             # w3
        wspec((tf, H), lambda i, k: (k, 0)),             # w2
    ]
    out_specs = pl.BlockSpec((tm, H), lambda i, k: (i, 0))

    # VMEM budget: pipelined tiles + f32 accumulator + f32 MXU intermediates.
    xs = jnp.dtype(x.dtype).itemsize
    ws = jnp.dtype(w1.dtype).itemsize
    est = (2 * tm * H * xs                          # x tile (double-buffered)
           + wbufs * (2 * H * tf + tf * H) * ws     # w1 + w3 + w2 tiles
           + 2 * tm * H * xs                        # output tile
           + tm * H * 4                             # f32 accumulator
           + 2 * tm * tf * 4)                       # f32 h1/h3 (compiler scratch)
    vmem_limit = int(min(max(int(1.3 * est), 32 << 20),
                         max(vmem_cap - (8 << 20), 32 << 20)))

    cost = pl.CostEstimate(
        flops=6 * Tp * H * F,
        transcendentals=Tp * F,
        bytes_accessed=int(Tp * H * xs                     # x in
                           + n_i * 3 * H * F * ws          # weights, re-streamed per i-tile
                           + Tp * H * xs),                 # out
    )

    out = pl.pallas_call(
        _mixtral_mlp_kernel,
        out_shape=jax.ShapeDtypeStruct((Tp, H), x.dtype),
        grid_spec=pltpu.PrefetchScalarGridSpec(
            num_scalar_prefetch=0,
            grid=grid,
            in_specs=in_specs,
            out_specs=out_specs,
            scratch_shapes=[pltpu.VMEM((tm, H), jnp.float32)],
        ),
        compiler_params=pltpu.CompilerParams(
            dimension_semantics=("parallel", "arbitrary"),
            vmem_limit_bytes=vmem_limit,
        ),
        cost_estimate=cost,
    )(x, w1, w3, w2)

    return out[:T] if Tp != T else out


def mixtral_mlp_ref(x, w1, w3, w2):
    h1 = jnp.dot(x, w1, preferred_element_type=jnp.float32)
    h3 = jnp.dot(x, w3, preferred_element_type=jnp.float32)
    g = (h1 * jax.nn.sigmoid(h1)) * h3
    out = jnp.dot(g.astype(w2.dtype), w2, preferred_element_type=jnp.float32)
    return out.astype(x.dtype)


if __name__ == "__main__":
    # Small, tile-friendly shapes consistent with MixtralMLP.forward:
    # tokens=256, hidden_size=256, intermediate_size=1024, bf16 weights/activations.
    T, H, F = 256, 256, 1024
    dtype = jnp.bfloat16

    key = jax.random.PRNGKey(0)
    kx, k1, k3, k2 = jax.random.split(key, 4)
    x = jax.random.normal(kx, (T, H), dtype=jnp.float32).astype(dtype)
    w1 = (jax.random.normal(k1, (H, F), dtype=jnp.float32) * (1.0 / H) ** 0.5).astype(dtype)
    w3 = (jax.random.normal(k3, (H, F), dtype=jnp.float32) * (1.0 / H) ** 0.5).astype(dtype)
    w2 = (jax.random.normal(k2, (F, H), dtype=jnp.float32) * (1.0 / F) ** 0.5).astype(dtype)

    # Prefill-style call: grid (2, 4) exercises the parallel token axis and the ffn
    # reduction axis with the f32 accumulator.
    out = jax.block_until_ready(mixtral_mlp(x, w1, w3, w2, tm=128, tf=256))
    ref = mixtral_mlp_ref(x, w1, w3, w2)
    assert out.shape == (T, H) and out.dtype == dtype
    assert jnp.allclose(out.astype(jnp.float32), ref.astype(jnp.float32),
                        atol=2.5e-2, rtol=2.5e-2), "prefill mismatch vs reference"

    # Decode-style call: ragged token count (padded to the sublane unit) and the
    # 3-deep weight buffering path.
    xd = x[:8]
    out_d = jax.block_until_ready(mixtral_mlp(xd, w1, w3, w2, tf=256))
    ref_d = mixtral_mlp_ref(xd, w1, w3, w2)
    assert out_d.shape == (8, H) and out_d.dtype == dtype
    assert jnp.allclose(out_d.astype(jnp.float32), ref_d.astype(jnp.float32),
                        atol=2.5e-2, rtol=2.5e-2), "decode mismatch vs reference"

    print("KERNEL_OK")
</pallas_src>

<mosaic_0001>
module attributes {stable_mosaic.version = 11 : i64} {
  func.func @_mixtral_mlp_kernel(%arg0: i32, %arg1: i32, %arg2: memref<128x256xbf16, #tpu.memory_space<vmem>>, %arg3: memref<256x256xbf16, #tpu.memory_space<vmem>>, %arg4: memref<256x256xbf16, #tpu.memory_space<vmem>>, %arg5: memref<256x256xbf16, #tpu.memory_space<vmem>>, %arg6: memref<128x256xbf16, #tpu.memory_space<vmem>>, %arg7: memref<128x256xf32, #tpu.memory_space<vmem>>) attributes {dimension_semantics = [#tpu.dimension_semantics<parallel>, #tpu.dimension_semantics<arbitrary>], iteration_bounds = array<i64: 2, 4>, scalar_prefetch = 0 : i64, scratch_operands = 1 : i64, tpu.core_type = #tpu.core_type<tc>, window_params = [{transform_indices = @transform_0, window_bounds = array<i64: 128, 256>}, {transform_indices = @transform_1, window_bounds = array<i64: 256, 256>}, {transform_indices = @transform_2, window_bounds = array<i64: 256, 256>}, {transform_indices = @transform_3, window_bounds = array<i64: 256, 256>}, {transform_indices = @transform_4, window_bounds = array<i64: 128, 256>}]} {
    %c0_i32 = arith.constant 0 : i32
    %0 = arith.cmpi eq, %arg1, %c0_i32 : i32
    %1 = arith.extui %0 : i1 to i32
    %c0_i32_0 = arith.constant 0 : i32
    %2 = arith.cmpi ne, %1, %c0_i32_0 : i32
    scf.if %2 {
      %cst_17 = arith.constant 0.000000e+00 : f32
      %25 = vector.broadcast %cst_17 : f32 to vector<128x256xf32>
      %c0_18 = arith.constant 0 : index
      %c0_19 = arith.constant 0 : index
      %26 = vector.load %arg7[%c0_18, %c0_19] : memref<128x256xf32, #tpu.memory_space<vmem>>, vector<128x256xf32>
      tpu.vector_store %arg7[%c0_18, %c0_19], %25 {strides = array<i32>} : memref<128x256xf32, #tpu.memory_space<vmem>>, vector<128x256xf32>,
    } else {
    }
    %c0 = arith.constant 0 : index
    %c0_1 = arith.constant 0 : index
    %3 = vector.load %arg2[%c0, %c0_1] : memref<128x256xbf16, #tpu.memory_space<vmem>>, vector<128x256xbf16>
    %c0_2 = arith.constant 0 : index
    %c0_3 = arith.constant 0 : index
    %4 = vector.load %arg3[%c0_2, %c0_3] : memref<256x256xbf16, #tpu.memory_space<vmem>>, vector<256x256xbf16>
    %cst = arith.constant dense<0.000000e+00> : vector<128x256xf32>
    %5 = tpu.matmul %3, %4, %cst {dimension_numbers = #tpu.dot_dimension_numbers<[1], [0], [0], [1], [0, 0, 1, 1], [], []>} : vector<128x256xbf16>, vector<256x256xbf16>, vector<128x256xf32> -> vector<128x256xf32>
    %c0_4 = arith.constant 0 : index
    %c0_5 = arith.constant 0 : index
    %6 = vector.load %arg4[%c0_4, %c0_5] : memref<256x256xbf16, #tpu.memory_space<vmem>>, vector<256x256xbf16>
    %cst_6 = arith.constant dense<0.000000e+00> : vector<128x256xf32>
    %7 = tpu.matmul %3, %6, %cst_6 {dimension_numbers = #tpu.dot_dimension_numbers<[1], [0], [0], [1], [0, 0, 1, 1], [], []>} : vector<128x256xbf16>, vector<256x256xbf16>, vector<128x256xf32> -> vector<128x256xf32>
    %cst_7 = arith.constant 0.000000e+00 : f32
    %8 = vector.broadcast %cst_7 : f32 to vector<128x256xf32>
    %9 = arith.subf %8, %5 : vector<128x256xf32>
    %10 = math.exp %9 : vector<128x256xf32>
    %cst_8 = arith.constant 1.000000e+00 : f32
    %11 = vector.broadcast %cst_8 : f32 to vector<128x256xf32>
    %12 = arith.addf %11, %10 : vector<128x256xf32>
    %13 = tpu.reciprocal %12 {approx = true} : vector<128x256xf32> -> vector<128x256xf32>
    %14 = arith.mulf %5, %13 : vector<128x256xf32>
    %15 = arith.mulf %14, %7 : vector<128x256xf32>
    %16 = arith.truncf %15 : vector<128x256xf32> to vector<128x256xbf16>
    %c0_9 = arith.constant 0 : index
    %c0_10 = arith.constant 0 : index
    %17 = vector.load %arg7[%c0_9, %c0_10] : memref<128x256xf32, #tpu.memory_space<vmem>>, vector<128x256xf32>
    %c0_11 = arith.constant 0 : index
    %c0_12 = arith.constant 0 : index
    %18 = vector.load %arg5[%c0_11, %c0_12] : memref<256x256xbf16, #tpu.memory_space<vmem>>, vector<256x256xbf16>
    %cst_13 = arith.constant dense<0.000000e+00> : vector<128x256xf32>
    %19 = tpu.matmul %16, %18, %cst_13 {dimension_numbers = #tpu.dot_dimension_numbers<[1], [0], [0], [1], [0, 0, 1, 1], [], []>} : vector<128x256xbf16>, vector<256x256xbf16>, vector<128x256xf32> -> vector<128x256xf32>
    %20 = arith.addf %17, %19 : vector<128x256xf32>
    %c0_14 = arith.constant 0 : index
    %c0_15 = arith.constant 0 : index
    %21 = vector.load %arg7[%c0_14, %c0_15] : memref<128x256xf32, #tpu.memory_space<vmem>>, vector<128x256xf32>
    tpu.vector_store %arg7[%c0_14, %c0_15], %20 {strides = array<i32>} : memref<128x256xf32, #tpu.memory_space<vmem>>, vector<128x256xf32>,
    %c3_i32 = arith.constant 3 : i32
    %22 = arith.cmpi eq, %arg1, %c3_i32 : i32
    %23 = arith.extui %22 : i1 to i32
    %c0_i32_16 = arith.constant 0 : i32
    %24 = arith.cmpi ne, %23, %c0_i32_16 : i32
    scf.if %24 {
      %c0_17 = arith.constant 0 : index
      %c0_18 = arith.constant 0 : index
      %25 = vector.load %arg7[%c0_17, %c0_18] : memref<128x256xf32, #tpu.memory_space<vmem>>, vector<128x256xf32>
      %26 = arith.truncf %25 : vector<128x256xf32> to vector<128x256xbf16>
      %c0_19 = arith.constant 0 : index
      %c0_20 = arith.constant 0 : index
      %27 = vector.load %arg6[%c0_19, %c0_20] : memref<128x256xbf16, #tpu.memory_space<vmem>>, vector<128x256xbf16>
      tpu.vector_store %arg6[%c0_19, %c0_20], %26 {strides = array<i32>} : memref<128x256xbf16, #tpu.memory_space<vmem>>, vector<128x256xbf16>,
    } else {
    }
    return
  }
  func.func @transform_0(%arg0: i32, %arg1: i32) -> (i32, i32) {
    %c0_i32 = arith.constant 0 : i32
    %c0_i32_0 = arith.constant 0 : i32
    return %arg0, %c0_i32 : i32, i32
  }
  func.func @transform_1(%arg0: i32, %arg1: i32) -> (i32, i32) {
    %c0_i32 = arith.constant 0 : i32
    %c0_i32_0 = arith.constant 0 : i32
    return %c0_i32, %arg1 : i32, i32
  }
  func.func @transform_2(%arg0: i32, %arg1: i32) -> (i32, i32) {
    %c0_i32 = arith.constant 0 : i32
    %c0_i32_0 = arith.constant 0 : i32
    return %c0_i32, %arg1 : i32, i32
  }
  func.func @transform_3(%arg0: i32, %arg1: i32) -> (i32, i32) {
    %c0_i32 = arith.constant 0 : i32
    %c0_i32_0 = arith.constant 0 : i32
    return %arg1, %c0_i32 : i32, i32
  }
  func.func @transform_4(%arg0: i32, %arg1: i32) -> (i32, i32) {
    %c0_i32 = arith.constant 0 : i32
    %c0_i32_0 = arith.constant 0 : i32
    return %arg0, %c0_i32 : i32, i32
  }
}

</mosaic_0001>

<llo_original>
// kernel: tpu_custom_call.1
$region0: #{tpu_custom_call.1}
  #allocation0 [shape = 'u32[]', space=smem, size = 0x4, offset = 0x4, fixed_abs, tag = 'smem constant byte address 0x4 - core index']
  #allocation1 [shape = 'u32[144,128]{1,0:T(1,128)}', space=vmem, size = 0x12000, scoped, tag = 'internal scratch']
  #allocation2 [shape = 'f32[128,256]{1,0:T(8,128)}', space=vmem, size = 0x20000, scoped, tag = 'scratch operand']
  %s0 = inlined_call_operand.hbm [shape: bf16[256,256], index: 0, kind: input, shape index: {}]
  %s1 = inlined_call_operand.hbm [shape: bf16[256,1024], index: 1, kind: input, shape index: {}]
  %s2 = inlined_call_operand.hbm [shape: bf16[256,1024], index: 2, kind: input, shape index: {}]
  %s3 = inlined_call_operand.hbm [shape: bf16[1024,256], index: 3, kind: input, shape index: {}]
  %s4 = inlined_call_operand.hbm [shape: bf16[256,256], index: 4, kind: output, shape index: {}]
  %s5 = sld [smem:[#allocation0]]
  $region73: #{tpu_custom_call.1} parent=0
    _
  %s7 = ssub.s32 1, %s5
  %s8 = scalar_select 0, %s7, %s5
  $region1: #{tpu_custom_call.1} parent=0
    #allocation3 [shape = 'u8[131072]{0}', space=vmem, size = 0x20000, scoped, tag = 'input window, operand 0']
    #allocation4 [shape = 's32[2]{0}', space=sflag, size = 0x8, scoped, tag = 'scoped memory for tpu_custom_call.1']
    #allocation5 [shape = 's32[2]{0}', space=sflag, size = 0x8, scoped, tag = 'scoped memory for tpu_custom_call.1']
    #allocation6 [shape = 'u8[262144]{0}', space=vmem, size = 0x40000, scoped, tag = 'input window, operand 1']
    #allocation7 [shape = 's32[2]{0}', space=sflag, size = 0x8, scoped, tag = 'scoped memory for tpu_custom_call.1']
    #allocation8 [shape = 'u8[262144]{0}', space=vmem, size = 0x40000, scoped, tag = 'input window, operand 2']
    #allocation9 [shape = 'u8[262144]{0}', space=vmem, size = 0x40000, scoped, tag = 'input window, operand 3']
    #allocation10 [shape = 's32[2]{0}', space=sflag, size = 0x8, scoped, tag = 'scoped memory for tpu_custom_call.1']
    #allocation11 [shape = 'u8[131072]{0}', space=vmem, size = 0x20000, scoped, tag = 'output window, operand 0']
    %9 = vsyncpa [#allocation4], 0
    %s10 = scalar_lea.sflag [#allocation4], 1
    %11 = vsyncpa %s10, 0
    %12 = vsyncpa [#allocation7], 0
    %s13 = scalar_lea.sflag [#allocation7], 1
    %14 = vsyncpa %s13, 0
    %15 = vsyncpa [#allocation10], 0
    %s16 = scalar_lea.sflag [#allocation10], 1
    %17 = vsyncpa %s16, 0
    %18 = vsyncpa [#allocation5], 0
    %s19 = scalar_lea.sflag [#allocation5], 1
    %20 = vsyncpa %s19, 0
    loop: start=0, step=1, limit=10
    $region2: #{tpu_custom_call.1} parent=1 // loop_pre_header
      _
    $region3: #{tpu_custom_call.1} parent=1 // loop_header
      %s22 = sphi 0, %s26
      %p23 = scmp.ge.s32.totalorder %s22, 10
      %s29 = sphi 0, %s41
      %s30 = sphi 0, %s37
      %s31 = sphi 0, %s29
      %s32 = sphi 0, %s30
      %s33 = sphi 0, %s31
      %s34 = sphi 0, %s32
      %s44 = sphi 0, %s46
      %s47 = sphi 0, %s44
      %s48 = sphi 0, %s47
      %s64 = sphi 0, %s48
      %s70 = sphi 0, %s72
      %s73 = sphi 0, %s70
      %s74 = sphi 0, %s73
      %s90 = sphi 0, %s74
      %s96 = sphi 0, %s98
      %s99 = sphi 0, %s96
      %s100 = sphi 0, %s99
      %s116 = sphi 0, %s100
      %s122 = sphi 0, %s124
      %s125 = sphi 0, %s122
      %s126 = sphi 0, %s125
      %s142 = sphi 0, %s126
      %s148 = sphi 0, %s150
      %s151 = sphi 0, %s148
      %s152 = sphi 0, %s151
      %s168 = sphi 0, %s152
    $region4: #{tpu_custom_call.1} parent=1 // loop_header_branch
      %25 = sbr.rel (%p23) target = $region8
    $region5: #{tpu_custom_call.1} parent=1 // loop_body
      %s27 = ssub.s32 %s22, 1
      %s28 = ssub.s32 %s22, 2
      %s35 = sadd.s32 1, %s30
      %p36 = scmp.ge.s32.totalorder %s35, 4
      %s37 = scalar_select %p36, 0, %s35
      %s38 = sadd.s32 1, %s29
      %s39 = scalar_select %p36, %s38, %s29
      %p40 = scmp.ge.s32.totalorder %s39, 2
      %s41 = scalar_select %p40, 0, %s39
      %s42 = ssub.s32 %s29, %s41
      %p43 = scmp.eq.s32.totalorder %s42, 0
      %s45 = sadd.s32 %s44, 1
      %s46 = scalar_select %p43, %s44, %s45
      %p49 = pneg %p43
      %p50 = scmp.eq.s32.totalorder %s22, 7
      %p51 = por %p49, %p50
      %p52 = scmp.ne.s32.totalorder %s44, %s47
      %p53 = scmp.eq.s32.totalorder %s22, 0
      %p54 = por %p52, %p53
      %p55 = scmp.ne.s32.totalorder %s44, %s47
      %p56 = scmp.eq.s32.totalorder %s27, 7
      %p57 = por %p55, %p56
      %p58 = scmp.ne.s32.totalorder %s47, %s48
      %p59 = scmp.eq.s32.totalorder %s27, 0
      %p60 = por %p58, %p59
      %p61 = scmp.ne.s32.totalorder %s47, %s48
      %p62 = scmp.eq.s32.totalorder %s28, 7
      %p63 = por %p61, %p62
      %p65 = scmp.ne.s32.totalorder %s48, %s64
      %p66 = scmp.eq.s32.totalorder %s28, 0
      %p67 = por %p65, %p66
      %s68 = ssub.s32 %s30, %s37
      %p69 = scmp.eq.s32.totalorder %s68, 0
      %s71 = sadd.s32 %s70, 1
      %s72 = scalar_select %p69, %s70, %s71
      %p75 = pneg %p69
      %p76 = scmp.eq.s32.totalorder %s22, 7
      %p77 = por %p75, %p76
      %p78 = scmp.ne.s32.totalorder %s70, %s73
      %p79 = scmp.eq.s32.totalorder %s22, 0
      %p80 = por %p78, %p79
      %p81 = scmp.ne.s32.totalorder %s70, %s73
      %p82 = scmp.eq.s32.totalorder %s27, 7
      %p83 = por %p81, %p82
      %p84 = scmp.ne.s32.totalorder %s73, %s74
      %p85 = scmp.eq.s32.totalorder %s27, 0
      %p86 = por %p84, %p85
      %p87 = scmp.ne.s32.totalorder %s73, %s74
      %p88 = scmp.eq.s32.totalorder %s28, 7
      %p89 = por %p87, %p88
      %p91 = scmp.ne.s32.totalorder %s74, %s90
      %p92 = scmp.eq.s32.totalorder %s28, 0
      %p93 = por %p91, %p92
      %s94 = ssub.s32 %s30, %s37
      %p95 = scmp.eq.s32.totalorder %s94, 0
      %s97 = sadd.s32 %s96, 1
      %s98 = scalar_select %p95, %s96, %s97
      %p101 = pneg %p95
      %p102 = scmp.eq.s32.totalorder %s22, 7
      %p103 = por %p101, %p102
      %p104 = scmp.ne.s32.totalorder %s96, %s99
      %p105 = scmp.eq.s32.totalorder %s22, 0
      %p106 = por %p104, %p105
      %p107 = scmp.ne.s32.totalorder %s96, %s99
      %p108 = scmp.eq.s32.totalorder %s27, 7
      %p109 = por %p107, %p108
      %p110 = scmp.ne.s32.totalorder %s99, %s100
      %p111 = scmp.eq.s32.totalorder %s27, 0
      %p112 = por %p110, %p111
      %p113 = scmp.ne.s32.totalorder %s99, %s100
      %p114 = scmp.eq.s32.totalorder %s28, 7
      %p115 = por %p113, %p114
      %p117 = scmp.ne.s32.totalorder %s100, %s116
      %p118 = scmp.eq.s32.totalorder %s28, 0
      %p119 = por %p117, %p118
      %s120 = ssub.s32 %s30, %s37
      %p121 = scmp.eq.s32.totalorder %s120, 0
      %s123 = sadd.s32 %s122, 1
      %s124 = scalar_select %p121, %s122, %s123
      %p127 = pneg %p121
      %p128 = scmp.eq.s32.totalorder %s22, 7
      %p129 = por %p127, %p128
      %p130 = scmp.ne.s32.totalorder %s122, %s125
      %p131 = scmp.eq.s32.totalorder %s22, 0
      %p132 = por %p130, %p131
      %p133 = scmp.ne.s32.totalorder %s122, %s125
      %p134 = scmp.eq.s32.totalorder %s27, 7
      %p135 = por %p133, %p134
      %p136 = scmp.ne.s32.totalorder %s125, %s126
      %p137 = scmp.eq.s32.totalorder %s27, 0
      %p138 = por %p136, %p137
      %p139 = scmp.ne.s32.totalorder %s125, %s126
      %p140 = scmp.eq.s32.totalorder %s28, 7
      %p141 = por %p139, %p140
      %p143 = scmp.ne.s32.totalorder %s126, %s142
      %p144 = scmp.eq.s32.totalorder %s28, 0
      %p145 = por %p143, %p144
      %s146 = ssub.s32 %s29, %s41
      %p147 = scmp.eq.s32.totalorder %s146, 0
      %s149 = sadd.s32 %s148, 1
      %s150 = scalar_select %p147, %s148, %s149
      %p153 = pneg %p147
      %p154 = scmp.eq.s32.totalorder %s22, 7
      %p155 = por %p153, %p154
      %p156 = scmp.ne.s32.totalorder %s148, %s151
      %p157 = scmp.eq.s32.totalorder %s22, 0
      %p158 = por %p156, %p157
      %p159 = scmp.ne.s32.totalorder %s148, %s151
      %p160 = scmp.eq.s32.totalorder %s27, 7
      %p161 = por %p159, %p160
      %p162 = scmp.ne.s32.totalorder %s151, %s152
      %p163 = scmp.eq.s32.totalorder %s27, 0
      %p164 = por %p162, %p163
      %p165 = scmp.ne.s32.totalorder %s151, %s152
      %p166 = scmp.eq.s32.totalorder %s28, 7
      %p167 = por %p165, %p166
      %p169 = scmp.ne.s32.totalorder %s152, %s168
      %p170 = scmp.eq.s32.totalorder %s28, 0
      %p171 = por %p169, %p170
      %p172 = scmp.le.s32.totalorder 1, %s22
      %p173 = scmp.lt.s32.totalorder %s22, 9
      %p174 = pnand %p172, %p173
      %p175 = pneg %p174
      // Predicated region
      $region9: #{tpu_custom_call.1} parent=5 // pred_check
        _
      $region10: #{tpu_custom_call.1} parent=5 // pred_check_branch
        %177 = sbr.rel (%p174) target = $region12
      $region11: #{tpu_custom_call.1} parent=5 // pred_region
        %s178 = ssub.s32 %s22, 1
      $region12: #{tpu_custom_call.1} parent=5 // pred_fallthru
        _
      %p179 = scmp.lt.s32.totalorder %s22, 8
      // Predicated region
      $region13: #{tpu_custom_call.1} parent=5 // pred_check
        %p180 = pneg %p179
      $region14: #{tpu_custom_call.1} parent=5 // pred_check_branch
        %182 = sbr.rel (%p180) target = $region16
      $region15: #{tpu_custom_call.1} parent=5 // pred_region
        // Predicated region
        $region17: #{tpu_custom_call.1} parent=15 // pred_check
          %p183 = pneg %p54
        $region18: #{tpu_custom_call.1} parent=15 // pred_check_branch
          %185 = sbr.rel (%p183) target = $region20
        $region19: #{tpu_custom_call.1} parent=15 // pred_region
          %s186 = sand.u32 %s44, 1
          %s187 = scalar_lea.sflag [#allocation4], %s186
          %s188 = sand.u32 %s44, 1
          %s189 = smul.addr %s188, 128
          %s190 = scalar_lea.vmem [#allocation3], %s189
          %s191 = smul.u32 16, %s29
          %s193 = ssub.s32 2048, 2048
          %194 = vsyncadd %s187, %s193
          %s195 = smul.addr %s191, 2
          %s196 = smul.addr %s195, 64
          %s197 = scalar_lea.hbm %s0, %s196
          %s198 = sshll.u32 %s190, 4
          %s199 = int_to_ptr.vmem [resolvable:$true] %s198
          %204 = dma.hbm_to_vmem [thread:$0]  %s197, 2048, %s199, %s187, 128, 128, 8
        $region20: #{tpu_custom_call.1} parent=15 // pred_fallthru
          _
        // Predicated region
        $region21: #{tpu_custom_call.1} parent=15 // pred_check
          %p205 = pneg %p80
        $region22: #{tpu_custom_call.1} parent=15 // pred_check_branch
          %207 = sbr.rel (%p205) target = $region24
        $region23: #{tpu_custom_call.1} parent=15 // pred_region
          %s208 = sand.u32 %s22, 1
          %s209 = scalar_lea.sflag [#allocation7], %s208
          %s210 = sand.u32 %s70, 1
          %s211 = smul.addr %s210, 256
          %s212 = scalar_lea.vmem [#allocation6], %s211
          %s213 = smul.u32 2, %s30
          %s215 = ssub.s32 4096, 4096
          %216 = vsyncadd %s209, %s215
          %s217 = smul.addr %s213, 64
          %s218 = scalar_lea.hbm %s1, %s217
          %s219 = sshll.u32 %s212, 4
          %s220 = int_to_ptr.vmem [resolvable:$true] %s219
          %225 = dma.hbm_to_vmem [thread:$0]  %s218, 4096, %s220, %s209, 512, 128, 8
        $region24: #{tpu_custom_call.1} parent=15 // pred_fallthru
          _
        // Predicated region
        $region25: #{tpu_custom_call.1} parent=15 // pred_check
          %p226 = pneg %p106
        $region26: #{tpu_custom_call.1} parent=15 // pred_check_branch
          %228 = sbr.rel (%p226) target = $region28
        $region27: #{tpu_custom_call.1} parent=15 // pred_region
          %s229 = sand.u32 %s22, 1
          %s230 = scalar_lea.sflag [#allocation7], %s229
          %s231 = sand.u32 %s96, 1
          %s232 = smul.addr %s231, 256
          %s233 = scalar_lea.vmem [#allocation8], %s232
          %s234 = smul.u32 2, %s30
          %s236 = ssub.s32 4096, 4096
          %237 = vsyncadd %s230, %s236
          %s238 = smul.addr %s234, 64
          %s239 = scalar_lea.hbm %s2, %s238
          %s240 = sshll.u32 %s233, 4
          %s241 = int_to_ptr.vmem [resolvable:$true] %s240
          %246 = dma.hbm_to_vmem [thread:$0]  %s239, 4096, %s241, %s230, 512, 128, 8
        $region28: #{tpu_custom_call.1} parent=15 // pred_fallthru
          _
        // Predicated region
        $region29: #{tpu_custom_call.1} parent=15 // pred_check
          %p247 = pneg %p132
        $region30: #{tpu_custom_call.1} parent=15 // pred_check_branch
          %249 = sbr.rel (%p247) target = $region32
        $region31: #{tpu_custom_call.1} parent=15 // pred_region
          %s250 = sand.u32 %s122, 1
          %s251 = scalar_lea.sflag [#allocation10], %s250
          %s252 = sand.u32 %s122, 1
          %s253 = smul.addr %s252, 256
          %s254 = scalar_lea.vmem [#allocation9], %s253
          %s255 = smul.u32 32, %s30
          %s257 = ssub.s32 4096, 4096
          %258 = vsyncadd %s251, %s257
          %s259 = smul.addr %s255, 2
          %s260 = smul.addr %s259, 64
          %s261 = scalar_lea.hbm %s3, %s260
          %s262 = sshll.u32 %s254, 4
          %s263 = int_to_ptr.vmem [resolvable:$true] %s262
          %268 = dma.hbm_to_vmem [thread:$0]  %s261, 4096, %s263, %s251, 128, 128, 8
        $region32: #{tpu_custom_call.1} parent=15 // pred_fallthru
          _
      $region16: #{tpu_custom_call.1} parent=5 // pred_fallthru
        _
      %p269 = scmp.le.s32.totalorder 1, %s22
      %p270 = scmp.lt.s32.totalorder %s22, 9
      %p271 = pnand %p269, %p270
      %p272 = pneg %p271
      // Predicated region
      $region33: #{tpu_custom_call.1} parent=5 // pred_check
        _
      $region34: #{tpu_custom_call.1} parent=5 // pred_check_branch
        %274 = sbr.rel (%p271) target = $region36
      $region35: #{tpu_custom_call.1} parent=5 // pred_region
        %s275 = ssub.s32 %s22, 1
        %s276 = sand.u32 %s47, 1
        %s277 = scalar_lea.sflag [#allocation4], %s276
        %s278 = sand.u32 %s47, 1
        %s279 = smul.addr %s278, 128
        %s280 = scalar_lea.vmem [#allocation3], %s279
        // Predicated region
        $region37: #{tpu_custom_call.1} parent=35 // pred_check
          %p281 = pneg %p60
        $region38: #{tpu_custom_call.1} parent=35 // pred_check_branch
          %283 = sbr.rel (%p281) target = $region40
        $region39: #{tpu_custom_call.1} parent=35 // pred_region
          %284 = dma.done %s277, 2048
        $region40: #{tpu_custom_call.1} parent=35 // pred_fallthru
          _
        %s285 = sand.u32 %s27, 1
        %s286 = scalar_lea.sflag [#allocation7], %s285
        %s287 = sand.u32 %s73, 1
        %s288 = smul.addr %s287, 256
        %s289 = scalar_lea.vmem [#allocation6], %s288
        // Predicated region
        $region41: #{tpu_custom_call.1} parent=35 // pred_check
          %p290 = pneg %p86
        $region42: #{tpu_custom_call.1} parent=35 // pred_check_branch
          %292 = sbr.rel (%p290) target = $region44
        $region43: #{tpu_custom_call.1} parent=35 // pred_region
          %293 = dma.done %s286, 4096
        $region44: #{tpu_custom_call.1} parent=35 // pred_fallthru
          _
        %s294 = sand.u32 %s27, 1
        %s295 = scalar_lea.sflag [#allocation7], %s294
        %s296 = sand.u32 %s99, 1
        %s297 = smul.addr %s296, 256
        %s298 = scalar_lea.vmem [#allocation8], %s297
        // Predicated region
        $region45: #{tpu_custom_call.1} parent=35 // pred_check
          %p299 = pneg %p112
        $region46: #{tpu_custom_call.1} parent=35 // pred_check_branch
          %301 = sbr.rel (%p299) target = $region48
        $region47: #{tpu_custom_call.1} parent=35 // pred_region
          %302 = dma.done %s295, 4096
        $region48: #{tpu_custom_call.1} parent=35 // pred_fallthru
          _
        %s303 = sand.u32 %s125, 1
        %s304 = scalar_lea.sflag [#allocation10], %s303
        %s305 = sand.u32 %s125, 1
        %s306 = smul.addr %s305, 256
        %s307 = scalar_lea.vmem [#allocation9], %s306
        // Predicated region
        $region49: #{tpu_custom_call.1} parent=35 // pred_check
          %p308 = pneg %p138
        $region50: #{tpu_custom_call.1} parent=35 // pred_check_branch
          %310 = sbr.rel (%p308) target = $region52
        $region51: #{tpu_custom_call.1} parent=35 // pred_region
          %311 = dma.done %s304, 4096
        $region52: #{tpu_custom_call.1} parent=35 // pred_fallthru
          _
        %s312 = sand.u32 %s47, 1
        %s313 = scalar_lea.sflag [#allocation4], %s312
        %s314 = sand.u32 %s47, 1
        %s315 = smul.addr %s314, 128
        %s316 = scalar_lea.vmem [#allocation3], %s315
        %p317 = pneg %p60
        %p318 = pneg %p57
        %s319 = sand.u32 %s27, 1
        %s320 = scalar_lea.sflag [#allocation7], %s319
        %s321 = sand.u32 %s73, 1
        %s322 = smul.addr %s321, 256
        %s323 = scalar_lea.vmem [#allocation6], %s322
        %p324 = pneg %p86
        %p325 = pneg %p83
        %s326 = sand.u32 %s27, 1
        %s327 = scalar_lea.sflag [#allocation7], %s326
        %s328 = sand.u32 %s99, 1
        %s329 = smul.addr %s328, 256
        %s330 = scalar_lea.vmem [#allocation8], %s329
        %p331 = pneg %p112
        %p332 = pneg %p109
        %s333 = sand.u32 %s125, 1
        %s334 = scalar_lea.sflag [#allocation10], %s333
        %s335 = sand.u32 %s125, 1
        %s336 = smul.addr %s335, 256
        %s337 = scalar_lea.vmem [#allocation9], %s336
        %p338 = pneg %p138
        %p339 = pneg %p135
        %p340 = pneg %p164
        %p341 = pneg %p161
        %s342 = sand.u32 %s151, 1
        %s343 = scalar_lea.sflag [#allocation5], %s342
        %s344 = sand.u32 %s151, 1
        %s345 = smul.addr %s344, 128
        %s346 = scalar_lea.vmem [#allocation11], %s345
        %s347 = smul.u32 16, %s31
        %s348 = smul.u32 2, %s32
        %s349 = smul.u32 2, %s32
        %s350 = smul.u32 32, %s32
        %s351 = smul.u32 16, %s31
        %p352 = scmp.eq.s32.totalorder %s32, 0
        // Predicated region
        $region53: #{tpu_custom_call.1} parent=35 // pred_check
          %p353 = pneg %p352
        $region54: #{tpu_custom_call.1} parent=35 // pred_check_branch
          %355 = sbr.rel (%p353) target = $region56
        $region55: #{tpu_custom_call.1} parent=35 // pred_region
          %356 = vst [vmem:[#allocation2] sm:$0xff] 0.0
          %357 = vst [vmem:[#allocation2 + $0x8] sm:$0xff] 0.0
          %358 = vst [vmem:[#allocation2 + $0x10] sm:$0xff] 0.0
          %359 = vst [vmem:[#allocation2 + $0x18] sm:$0xff] 0.0
          %360 = vst [vmem:[#allocation2 + $0x20] sm:$0xff] 0.0
          %361 = vst [vmem:[#allocation2 + $0x28] sm:$0xff] 0.0
          %362 = vst [vmem:[#allocation2 + $0x30] sm:$0xff] 0.0
          %363 = vst [vmem:[#allocation2 + $0x38] sm:$0xff] 0.0
          %364 = vst [vmem:[#allocation2 + $0x40] sm:$0xff] 0.0
          %365 = vst [vmem:[#allocation2 + $0x48] sm:$0xff] 0.0
          %366 = vst [vmem:[#allocation2 + $0x50] sm:$0xff] 0.0
          %367 = vst [vmem:[#allocation2 + $0x58] sm:$0xff] 0.0
          %368 = vst [vmem:[#allocation2 + $0x60] sm:$0xff] 0.0
          %369 = vst [vmem:[#allocation2 + $0x68] sm:$0xff] 0.0
          %370 = vst [vmem:[#allocation2 + $0x70] sm:$0xff] 0.0
          %371 = vst [vmem:[#allocation2 + $0x78] sm:$0xff] 0.0
          %372 = vst [vmem:[#allocation2 + $0x80] sm:$0xff] 0.0
          %373 = vst [vmem:[#allocation2 + $0x88] sm:$0xff] 0.0
          %374 = vst [vmem:[#allocation2 + $0x90] sm:$0xff] 0.0
          %375 = vst [vmem:[#allocation2 + $0x98] sm:$0xff] 0.0
          %376 = vst [vmem:[#allocation2 + $0xa0] sm:$0xff] 0.0
          %377 = vst [vmem:[#allocation2 + $0xa8] sm:$0xff] 0.0
          %378 = vst [vmem:[#allocation2 + $0xb0] sm:$0xff] 0.0
          %379 = vst [vmem:[#allocation2 + $0xb8] sm:$0xff] 0.0
          %380 = vst [vmem:[#allocation2 + $0xc0] sm:$0xff] 0.0
          %381 = vst [vmem:[#allocation2 + $0xc8] sm:$0xff] 0.0
          %382 = vst [vmem:[#allocation2 + $0xd0] sm:$0xff] 0.0
          %383 = vst [vmem:[#allocation2 + $0xd8] sm:$0xff] 0.0
          %384 = vst [vmem:[#allocation2 + $0xe0] sm:$0xff] 0.0
          %385 = vst [vmem:[#allocation2 + $0xe8] sm:$0xff] 0.0
          %386 = vst [vmem:[#allocation2 + $0xf0] sm:$0xff] 0.0
          %387 = vst [vmem:[#allocation2 + $0xf8] sm:$0xff] 0.0
        $region56: #{tpu_custom_call.1} parent=35 // pred_fallthru
          _
        %v388 = vld [vmem:[%s280] sm:$0xff]
        %v389 = vld [vmem:[%s280 + $0x8] sm:$0xff]
        %v390 = vld [vmem:[%s280 + $0x10] sm:$0xff]
        %v391 = vld [vmem:[%s280 + $0x18] sm:$0xff]
        %v392 = vld [vmem:[%s280 + $0x20] sm:$0xff]
        %v393 = vld [vmem:[%s280 + $0x28] sm:$0xff]
        %v394 = vld [vmem:[%s280 + $0x30] sm:$0xff]
        %v395 = vld [vmem:[%s280 + $0x38] sm:$0xff]
        %v396 = vld [vmem:[%s280 + $0x40] sm:$0xff]
        %v397 = vld [vmem:[%s280 + $0x48] sm:$0xff]
        %v398 = vld [vmem:[%s280 + $0x50] sm:$0xff]
        %v399 = vld [vmem:[%s280 + $0x58] sm:$0xff]
        %v400 = vld [vmem:[%s280 + $0x60] sm:$0xff]
        %v401 = vld [vmem:[%s280 + $0x68] sm:$0xff]
        %v402 = vld [vmem:[%s280 + $0x70] sm:$0xff]
        %v403 = vld [vmem:[%s280 + $0x78] sm:$0xff]
        %v404 = vld [vmem:[%s289] sm:$0xff]
        %v405 = vld [vmem:[%s289 + $0x8] sm:$0xff]
        %v406 = vld [vmem:[%s289 + $0x10] sm:$0xff]
        %v407 = vld [vmem:[%s289 + $0x18] sm:$0xff]
        %v408 = vld [vmem:[%s289 + $0x20] sm:$0xff]
        %v409 = vld [vmem:[%s289 + $0x28] sm:$0xff]
        %v410 = vld [vmem:[%s289 + $0x30] sm:$0xff]
        %v411 = vld [vmem:[%s289 + $0x38] sm:$0xff]
        %v412 = vld [vmem:[%s289 + $0x40] sm:$0xff]
        %v413 = vld [vmem:[%s289 + $0x48] sm:$0xff]
        %v414 = vld [vmem:[%s289 + $0x50] sm:$0xff]
        %v415 = vld [vmem:[%s289 + $0x58] sm:$0xff]
        %v416 = vld [vmem:[%s289 + $0x60] sm:$0xff]
        %v417 = vld [vmem:[%s289 + $0x68] sm:$0xff]
        %v418 = vld [vmem:[%s289 + $0x70] sm:$0xff]
        %v419 = vld [vmem:[%s289 + $0x78] sm:$0xff]
        %v420 = vld [vmem:[%s289 + $0x80] sm:$0xff]
        %v421 = vld [vmem:[%s289 + $0x88] sm:$0xff]
        %v422 = vld [vmem:[%s289 + $0x90] sm:$0xff]
        %v423 = vld [vmem:[%s289 + $0x98] sm:$0xff]
        %v424 = vld [vmem:[%s289 + $0xa0] sm:$0xff]
        %v425 = vld [vmem:[%s289 + $0xa8] sm:$0xff]
        %v426 = vld [vmem:[%s289 + $0xb0] sm:$0xff]
        %v427 = vld [vmem:[%s289 + $0xb8] sm:$0xff]
        %v428 = vld [vmem:[%s289 + $0xc0] sm:$0xff]
        %v429 = vld [vmem:[%s289 + $0xc8] sm:$0xff]
        %v430 = vld [vmem:[%s289 + $0xd0] sm:$0xff]
        %v431 = vld [vmem:[%s289 + $0xd8] sm:$0xff]
        %v432 = vld [vmem:[%s289 + $0xe0] sm:$0xff]
        %v433 = vld [vmem:[%s289 + $0xe8] sm:$0xff]
        %v434 = vld [vmem:[%s289 + $0xf0] sm:$0xff]
        %v435 = vld [vmem:[%s289 + $0xf8] sm:$0xff]
        %v452 = vunpack.c.l.b16 %v388
        %v453 = vunpack.c.h.b16 %v388
        %v454 = vunpack.c.l.b16 %v389
        %v455 = vunpack.c.h.b16 %v389
        %v456 = vunpack.c.l.b16 %v390
        %v457 = vunpack.c.h.b16 %v390
        %v458 = vunpack.c.l.b16 %v391
        %v459 = vunpack.c.h.b16 %v391
        %v460 = vunpack.c.l.b16 %v392
        %v461 = vunpack.c.h.b16 %v392
        %v462 = vunpack.c.l.b16 %v393
        %v463 = vunpack.c.h.b16 %v393
        %v464 = vunpack.c.l.b16 %v394
        %v465 = vunpack.c.h.b16 %v394
        %v466 = vunpack.c.l.b16 %v395
        %v467 = vunpack.c.h.b16 %v395
        %v468 = vunpack.c.l.b16 %v396
        %v469 = vunpack.c.h.b16 %v396
        %v470 = vunpack.c.l.b16 %v397
        %v471 = vunpack.c.h.b16 %v397
        %v472 = vunpack.c.l.b16 %v398
        %v473 = vunpack.c.h.b16 %v398
        %v474 = vunpack.c.l.b16 %v399
        %v475 = vunpack.c.h.b16 %v399
        %v476 = vunpack.c.l.b16 %v400
        %v477 = vunpack.c.h.b16 %v400
        %v478 = vunpack.c.l.b16 %v401
        %v479 = vunpack.c.h.b16 %v401
        %v480 = vunpack.c.l.b16 %v402
        %v481 = vunpack.c.h.b16 %v402
        %v482 = vunpack.c.l.b16 %v403
        %v483 = vunpack.c.h.b16 %v403
        %v484 = vpack.c.b16 %v454, %v452
        %v485 = vpack.c.b16 %v455, %v453
        %v486 = vpack.c.b16 %v458, %v456
        %v487 = vpack.c.b16 %v459, %v457
        %v488 = vpack.c.b16 %v462, %v460
        %v489 = vpack.c.b16 %v463, %v461
        %v490 = vpack.c.b16 %v466, %v464
        %v491 = vpack.c.b16 %v467, %v465
        %v492 = vpack.c.b16 %v470, %v468
        %v493 = vpack.c.b16 %v471, %v469
        %v494 = vpack.c.b16 %v474, %v472
        %v495 = vpack.c.b16 %v475, %v473
        %v496 = vpack.c.b16 %v478, %v476
        %v497 = vpack.c.b16 %v479, %v477
        %v498 = vpack.c.b16 %v482, %v480
        %v499 = vpack.c.b16 %v483, %v481
        %v548 = vunpack.c.l.b16 %v404
        %v549 = vunpack.c.h.b16 %v404
        %v550 = vunpack.c.l.b16 %v405
        %v551 = vunpack.c.h.b16 %v405
        %v552 = vunpack.c.l.b16 %v406
        %v553 = vunpack.c.h.b16 %v406
        %v554 = vunpack.c.l.b16 %v407
        %v555 = vunpack.c.h.b16 %v407
        %v556 = vunpack.c.l.b16 %v408
        %v557 = vunpack.c.h.b16 %v408
        %v558 = vunpack.c.l.b16 %v409
        %v559 = vunpack.c.h.b16 %v409
        %v560 = vunpack.c.l.b16 %v410
        %v561 = vunpack.c.h.b16 %v410
        %v562 = vunpack.c.l.b16 %v411
        %v563 = vunpack.c.h.b16 %v411
        %v564 = vunpack.c.l.b16 %v412
        %v565 = vunpack.c.h.b16 %v412
        %v566 = vunpack.c.l.b16 %v413
        %v567 = vunpack.c.h.b16 %v413
        %v568 = vunpack.c.l.b16 %v414
        %v569 = vunpack.c.h.b16 %v414
        %v570 = vunpack.c.l.b16 %v415
        %v571 = vunpack.c.h.b16 %v415
        %v572 = vunpack.c.l.b16 %v416
        %v573 = vunpack.c.h.b16 %v416
        %v574 = vunpack.c.l.b16 %v417
        %v575 = vunpack.c.h.b16 %v417
        %v576 = vunpack.c.l.b16 %v418
        %v577 = vunpack.c.h.b16 %v418
        %v578 = vunpack.c.l.b16 %v419
        %v579 = vunpack.c.h.b16 %v419
        %v580 = vunpack.c.l.b16 %v420
        %v581 = vunpack.c.h.b16 %v420
        %v582 = vunpack.c.l.b16 %v421
        %v583 = vunpack.c.h.b16 %v421
        %v584 = vunpack.c.l.b16 %v422
        %v585 = vunpack.c.h.b16 %v422
        %v586 = vunpack.c.l.b16 %v423
        %v587 = vunpack.c.h.b16 %v423
        %v588 = vunpack.c.l.b16 %v424
        %v589 = vunpack.c.h.b16 %v424
        %v590 = vunpack.c.l.b16 %v425
        %v591 = vunpack.c.h.b16 %v425
        %v592 = vunpack.c.l.b16 %v426
        %v593 = vunpack.c.h.b16 %v426
        %v594 = vunpack.c.l.b16 %v427
        %v595 = vunpack.c.h.b16 %v427
        %v596 = vunpack.c.l.b16 %v428
        %v597 = vunpack.c.h.b16 %v428
        %v598 = vunpack.c.l.b16 %v429
        %v599 = vunpack.c.h.b16 %v429
        %v600 = vunpack.c.l.b16 %v430
        %v601 = vunpack.c.h.b16 %v430
        %v602 = vunpack.c.l.b16 %v431
        %v603 = vunpack.c.h.b16 %v431
        %v604 = vunpack.c.l.b16 %v432
        %v605 = vunpack.c.h.b16 %v432
        %v606 = vunpack.c.l.b16 %v433
        %v607 = vunpack.c.h.b16 %v433
        %v608 = vunpack.c.l.b16 %v434
        %v609 = vunpack.c.h.b16 %v434
        %v610 = vunpack.c.l.b16 %v435
        %v611 = vunpack.c.h.b16 %v435
        %v612 = vpack.c.b16 %v550, %v548
        %v613 = vpack.c.b16 %v551, %v549
        %v614 = vpack.c.b16 %v554, %v552
        %v615 = vpack.c.b16 %v555, %v553
        %v616 = vpack.c.b16 %v558, %v556
        %v617 = vpack.c.b16 %v559, %v557
        %v618 = vpack.c.b16 %v562, %v560
        %v619 = vpack.c.b16 %v563, %v561
        %v620 = vpack.c.b16 %v566, %v564
        %v621 = vpack.c.b16 %v567, %v565
        %v622 = vpack.c.b16 %v570, %v568
        %v623 = vpack.c.b16 %v571, %v569
        %v624 = vpack.c.b16 %v574, %v572
        %v625 = vpack.c.b16 %v575, %v573
        %v626 = vpack.c.b16 %v578, %v576
        %v627 = vpack.c.b16 %v579, %v577
        %v628 = vpack.c.b16 %v582, %v580
        %v629 = vpack.c.b16 %v583, %v581
        %v630 = vpack.c.b16 %v586, %v584
        %v631 = vpack.c.b16 %v587, %v585
        %v632 = vpack.c.b16 %v590, %v588
        %v633 = vpack.c.b16 %v591, %v589
        %v634 = vpack.c.b16 %v594, %v592
        %v635 = vpack.c.b16 %v595, %v593
        %v636 = vpack.c.b16 %v598, %v596
        %v637 = vpack.c.b16 %v599, %v597
        %v638 = vpack.c.b16 %v602, %v600
        %v639 = vpack.c.b16 %v603, %v601
        %v640 = vpack.c.b16 %v606, %v604
        %v641 = vpack.c.b16 %v607, %v605
        %v642 = vpack.c.b16 %v610, %v608
        %v643 = vpack.c.b16 %v611, %v609
        %676 = vmatprep.subr.bf16.mxu0 %v627
        %677 = vmatpush1.bf16.msra.mxu0 %v626
        %678 = vmatprep.subr.bf16.mxu0 %v625
        %679 = vmatpush1.bf16.msra.mxu0 %v624
        %680 = vmatprep.subr.bf16.mxu0 %v623
        %681 = vmatpush1.bf16.msra.mxu0 %v622
        %682 = vmatprep.subr.bf16.mxu0 %v621
        %683 = vmatpush1.bf16.msra.mxu0 %v620
        %684 = vmatprep.subr.bf16.mxu0 %v619
        %685 = vmatpush1.bf16.msra.mxu0 %v618
        %686 = vmatprep.subr.bf16.mxu0 %v617
        %687 = vmatpush1.bf16.msra.mxu0 %v616
        %688 = vmatprep.subr.bf16.mxu0 %v615
        %689 = vmatpush1.bf16.msra.mxu0 %v614
        %690 = vmatprep.subr.bf16.mxu0 %v613
        %691 = vmatpush1.bf16.msra.mxu0 %v612
        %692 = vmatprep.subr.bf16.mxu0 %v643
        %693 = vmatpush2.bf16.msra.mxu0 %v642
        %694 = vmatprep.subr.bf16.mxu0 %v641
        %695 = vmatpush2.bf16.msra.mxu0 %v640
        %696 = vmatprep.subr.bf16.mxu0 %v639
        %697 = vmatpush2.bf16.msra.mxu0 %v638
        %698 = vmatprep.subr.bf16.mxu0 %v637
        %699 = vmatpush2.bf16.msra.mxu0 %v636
        %700 = vmatprep.subr.bf16.mxu0 %v635
        %701 = vmatpush2.bf16.msra.mxu0 %v634
        %702 = vmatprep.subr.bf16.mxu0 %v633
        %703 = vmatpush2.bf16.msra.mxu0 %v632
        %704 = vmatprep.subr.bf16.mxu0 %v631
        %705 = vmatpush2.bf16.msra.mxu0 %v630
        %706 = vmatprep.subr.bf16.mxu0 %v629
        %707 = vmatpush2.bf16.msra.mxu0 %v628
        %708 = vmatprep.mubr.bf16.mxu0 %v485
        %709 = vmatmul.mubr.bf16.gmra.mxu0 %v484
        %v710 = vpop.f32.mrf.mxu0
        %v711 = vadd.f32 0.0, %v710
        %v712 = vpop.f32.mrf.mxu0
        %v713 = vadd.f32 0.0, %v712
        %v714 = vpop.f32.mrf.mxu0
        %v715 = vadd.f32 0.0, %v714
        %v716 = vpop.f32.mrf.mxu0
        %v717 = vadd.f32 0.0, %v716
        %718 = vmatprep.mubr.bf16.mxu0 %v487
        %719 = vmatmul.mubr.bf16.gmra.mxu0 %v486
        %v720 = vpop.f32.mrf.mxu0
        %v721 = vadd.f32 0.0, %v720
        %v722 = vpop.f32.mrf.mxu0
        %v723 = vadd.f32 0.0, %v722
        %v724 = vpop.f32.mrf.mxu0
        %v725 = vadd.f32 0.0, %v724
        %v726 = vpop.f32.mrf.mxu0
        %v727 = vadd.f32 0.0, %v726
        %728 = vmatprep.mubr.bf16.mxu0 %v489
        %729 = vmatmul.mubr.bf16.gmra.mxu0 %v488
        %v730 = vpop.f32.mrf.mxu0
        %v731 = vadd.f32 0.0, %v730
        %v732 = vpop.f32.mrf.mxu0
        %v733 = vadd.f32 0.0, %v732
        %v734 = vpop.f32.mrf.mxu0
        %v735 = vadd.f32 0.0, %v734
        %v736 = vpop.f32.mrf.mxu0
        %v737 = vadd.f32 0.0, %v736
        %738 = vmatprep.mubr.bf16.mxu0 %v491
        %739 = vmatmul.mubr.bf16.gmra.mxu0 %v490
        %v740 = vpop.f32.mrf.mxu0
        %v741 = vadd.f32 0.0, %v740
        %v742 = vpop.f32.mrf.mxu0
        %v743 = vadd.f32 0.0, %v742
        %v744 = vpop.f32.mrf.mxu0
        %v745 = vadd.f32 0.0, %v744
        %v746 = vpop.f32.mrf.mxu0
        %v747 = vadd.f32 0.0, %v746
        %748 = vmatprep.mubr.bf16.mxu0 %v493
        %749 = vmatmul.mubr.bf16.gmra.mxu0 %v492
        %v750 = vpop.f32.mrf.mxu0
        %v751 = vadd.f32 0.0, %v750
        %v752 = vpop.f32.mrf.mxu0
        %v753 = vadd.f32 0.0, %v752
        %v754 = vpop.f32.mrf.mxu0
        %v755 = vadd.f32 0.0, %v754
        %v756 = vpop.f32.mrf.mxu0
        %v757 = vadd.f32 0.0, %v756
        %758 = vmatprep.mubr.bf16.mxu0 %v495
        %759 = vmatmul.mubr.bf16.gmra.mxu0 %v494
        %v760 = vpop.f32.mrf.mxu0
        %v761 = vadd.f32 0.0, %v760
        %v762 = vpop.f32.mrf.mxu0
        %v763 = vadd.f32 0.0, %v762
        %v764 = vpop.f32.mrf.mxu0
        %v765 = vadd.f32 0.0, %v764
        %v766 = vpop.f32.mrf.mxu0
        %v767 = vadd.f32 0.0, %v766
        %768 = vmatprep.mubr.bf16.mxu0 %v497
        %769 = vmatmul.mubr.bf16.gmra.mxu0 %v496
        %v770 = vpop.f32.mrf.mxu0
        %v771 = vadd.f32 0.0, %v770
        %v772 = vpop.f32.mrf.mxu0
        %v773 = vadd.f32 0.0, %v772
        %v774 = vpop.f32.mrf.mxu0
        %v775 = vadd.f32 0.0, %v774
        %v776 = vpop.f32.mrf.mxu0
        %v777 = vadd.f32 0.0, %v776
        %778 = vmatprep.mubr.bf16.mxu0 %v499
        %779 = vmatmul.mubr.bf16.gmra.mxu0 %v498
        %v780 = vpop.f32.mrf.mxu0
        %v781 = vadd.f32 0.0, %v780
        %v782 = vpop.f32.mrf.mxu0
        %v783 = vadd.f32 0.0, %v782
        %v784 = vpop.f32.mrf.mxu0
        %v785 = vadd.f32 0.0, %v784
        %v786 = vpop.f32.mrf.mxu0
        %v787 = vadd.f32 0.0, %v786
        %788 = vdwg.mxu0
        %v789 = vld [vmem:[%s298] sm:$0xff]
        %v790 = vld [vmem:[%s298 + $0x8] sm:$0xff]
        %v791 = vld [vmem:[%s298 + $0x10] sm:$0xff]
        %v792 = vld [vmem:[%s298 + $0x18] sm:$0xff]
        %v793 = vld [vmem:[%s298 + $0x20] sm:$0xff]
        %v794 = vld [vmem:[%s298 + $0x28] sm:$0xff]
        %v795 = vld [vmem:[%s298 + $0x30] sm:$0xff]
        %v796 = vld [vmem:[%s298 + $0x38] sm:$0xff]
        %v797 = vld [vmem:[%s298 + $0x40] sm:$0xff]
        %v798 = vld [vmem:[%s298 + $0x48] sm:$0xff]
        %v799 = vld [vmem:[%s298 + $0x50] sm:$0xff]
        %v800 = vld [vmem:[%s298 + $0x58] sm:$0xff]
        %v801 = vld [vmem:[%s298 + $0x60] sm:$0xff]
        %v802 = vld [vmem:[%s298 + $0x68] sm:$0xff]
        %v803 = vld [vmem:[%s298 + $0x70] sm:$0xff]
        %v804 = vld [vmem:[%s298 + $0x78] sm:$0xff]
        %v805 = vld [vmem:[%s298 + $0x80] sm:$0xff]
        %v806 = vld [vmem:[%s298 + $0x88] sm:$0xff]
        %v807 = vld [vmem:[%s298 + $0x90] sm:$0xff]
        %v808 = vld [vmem:[%s298 + $0x98] sm:$0xff]
        %v809 = vld [vmem:[%s298 + $0xa0] sm:$0xff]
        %v810 = vld [vmem:[%s298 + $0xa8] sm:$0xff]
        %v811 = vld [vmem:[%s298 + $0xb0] sm:$0xff]
        %v812 = vld [vmem:[%s298 + $0xb8] sm:$0xff]
        %v813 = vld [vmem:[%s298 + $0xc0] sm:$0xff]
        %v814 = vld [vmem:[%s298 + $0xc8] sm:$0xff]
        %v815 = vld [vmem:[%s298 + $0xd0] sm:$0xff]
        %v816 = vld [vmem:[%s298 + $0xd8] sm:$0xff]
        %v817 = vld [vmem:[%s298 + $0xe0] sm:$0xff]
        %v818 = vld [vmem:[%s298 + $0xe8] sm:$0xff]
        %v819 = vld [vmem:[%s298 + $0xf0] sm:$0xff]
        %v820 = vld [vmem:[%s298 + $0xf8] sm:$0xff]
        %v853 = vunpack.c.l.b16 %v789
        %v854 = vunpack.c.h.b16 %v789
        %v855 = vunpack.c.l.b16 %v790
        %v856 = vunpack.c.h.b16 %v790
        %v857 = vunpack.c.l.b16 %v791
        %v858 = vunpack.c.h.b16 %v791
        %v859 = vunpack.c.l.b16 %v792
        %v860 = vunpack.c.h.b16 %v792
        %v861 = vunpack.c.l.b16 %v793
        %v862 = vunpack.c.h.b16 %v793
        %v863 = vunpack.c.l.b16 %v794
        %v864 = vunpack.c.h.b16 %v794
        %v865 = vunpack.c.l.b16 %v795
        %v866 = vunpack.c.h.b16 %v795
        %v867 = vunpack.c.l.b16 %v796
        %v868 = vunpack.c.h.b16 %v796
        %v869 = vunpack.c.l.b16 %v797
        %v870 = vunpack.c.h.b16 %v797
        %v871 = vunpack.c.l.b16 %v798
        %v872 = vunpack.c.h.b16 %v798
        %v873 = vunpack.c.l.b16 %v799
        %v874 = vunpack.c.h.b16 %v799
        %v875 = vunpack.c.l.b16 %v800
        %v876 = vunpack.c.h.b16 %v800
        %v877 = vunpack.c.l.b16 %v801
        %v878 = vunpack.c.h.b16 %v801
        %v879 = vunpack.c.l.b16 %v802
        %v880 = vunpack.c.h.b16 %v802
        %v881 = vunpack.c.l.b16 %v803
        %v882 = vunpack.c.h.b16 %v803
        %v883 = vunpack.c.l.b16 %v804
        %v884 = vunpack.c.h.b16 %v804
        %v885 = vunpack.c.l.b16 %v805
        %v886 = vunpack.c.h.b16 %v805
        %v887 = vunpack.c.l.b16 %v806
        %v888 = vunpack.c.h.b16 %v806
        %v889 = vunpack.c.l.b16 %v807
        %v890 = vunpack.c.h.b16 %v807
        %v891 = vunpack.c.l.b16 %v808
        %v892 = vunpack.c.h.b16 %v808
        %v893 = vunpack.c.l.b16 %v809
        %v894 = vunpack.c.h.b16 %v809
        %v895 = vunpack.c.l.b16 %v810
        %v896 = vunpack.c.h.b16 %v810
        %v897 = vunpack.c.l.b16 %v811
        %v898 = vunpack.c.h.b16 %v811
        %v899 = vunpack.c.l.b16 %v812
        %v900 = vunpack.c.h.b16 %v812
        %v901 = vunpack.c.l.b16 %v813
        %v902 = vunpack.c.h.b16 %v813
        %v903 = vunpack.c.l.b16 %v814
        %v904 = vunpack.c.h.b16 %v814
        %v905 = vunpack.c.l.b16 %v815
        %v906 = vunpack.c.h.b16 %v815
        %v907 = vunpack.c.l.b16 %v816
        %v908 = vunpack.c.h.b16 %v816
        %v909 = vunpack.c.l.b16 %v817
        %v910 = vunpack.c.h.b16 %v817
        %v911 = vunpack.c.l.b16 %v818
        %v912 = vunpack.c.h.b16 %v818
        %v913 = vunpack.c.l.b16 %v819
        %v914 = vunpack.c.h.b16 %v819
        %v915 = vunpack.c.l.b16 %v820
        %v916 = vunpack.c.h.b16 %v820
        %v917 = vpack.c.b16 %v855, %v853
        %v918 = vpack.c.b16 %v856, %v854
        %v919 = vpack.c.b16 %v859, %v857
        %v920 = vpack.c.b16 %v860, %v858
        %v921 = vpack.c.b16 %v863, %v861
        %v922 = vpack.c.b16 %v864, %v862
        %v923 = vpack.c.b16 %v867, %v865
        %v924 = vpack.c.b16 %v868, %v866
        %v925 = vpack.c.b16 %v871, %v869
        %v926 = vpack.c.b16 %v872, %v870
        %v927 = vpack.c.b16 %v875, %v873
        %v928 = vpack.c.b16 %v876, %v874
        %v929 = vpack.c.b16 %v879, %v877
        %v930 = vpack.c.b16 %v880, %v878
        %v931 = vpack.c.b16 %v883, %v881
        %v932 = vpack.c.b16 %v884, %v882
        %v933 = vpack.c.b16 %v887, %v885
        %v934 = vpack.c.b16 %v888, %v886
        %v935 = vpack.c.b16 %v891, %v889
        %v936 = vpack.c.b16 %v892, %v890
        %v937 = vpack.c.b16 %v895, %v893
        %v938 = vpack.c.b16 %v896, %v894
        %v939 = vpack.c.b16 %v899, %v897
        %v940 = vpack.c.b16 %v900, %v898
        %v941 = vpack.c.b16 %v903, %v901
        %v942 = vpack.c.b16 %v904, %v902
        %v943 = vpack.c.b16 %v907, %v905
        %v944 = vpack.c.b16 %v908, %v906
        %v945 = vpack.c.b16 %v911, %v909
        %v946 = vpack.c.b16 %v912, %v910
        %v947 = vpack.c.b16 %v915, %v913
        %v948 = vpack.c.b16 %v916, %v914
        %981 = vmatprep.subr.bf16.mxu0 %v932
        %982 = vmatpush1.bf16.msra.mxu0 %v931
        %983 = vmatprep.subr.bf16.mxu0 %v930
        %984 = vmatpush1.bf16.msra.mxu0 %v929
        %985 = vmatprep.subr.bf16.mxu0 %v928
        %986 = vmatpush1.bf16.msra.mxu0 %v927
        %987 = vmatprep.subr.bf16.mxu0 %v926
        %988 = vmatpush1.bf16.msra.mxu0 %v925
        %989 = vmatprep.subr.bf16.mxu0 %v924
        %990 = vmatpush1.bf16.msra.mxu0 %v923
        %991 = vmatprep.subr.bf16.mxu0 %v922
        %992 = vmatpush1.bf16.msra.mxu0 %v921
        %993 = vmatprep.subr.bf16.mxu0 %v920
        %994 = vmatpush1.bf16.msra.mxu0 %v919
        %995 = vmatprep.subr.bf16.mxu0 %v918
        %996 = vmatpush1.bf16.msra.mxu0 %v917
        %997 = vmatprep.subr.bf16.mxu0 %v948
        %998 = vmatpush2.bf16.msra.mxu0 %v947
        %999 = vmatprep.subr.bf16.mxu0 %v946
        %1000 = vmatpush2.bf16.msra.mxu0 %v945
        %1001 = vmatprep.subr.bf16.mxu0 %v944
        %1002 = vmatpush2.bf16.msra.mxu0 %v943
        %1003 = vmatprep.subr.bf16.mxu0 %v942
        %1004 = vmatpush2.bf16.msra.mxu0 %v941
        %1005 = vmatprep.subr.bf16.mxu0 %v940
        %1006 = vmatpush2.bf16.msra.mxu0 %v939
        %1007 = vmatprep.subr.bf16.mxu0 %v938
        %1008 = vmatpush2.bf16.msra.mxu0 %v937
        %1009 = vmatprep.subr.bf16.mxu0 %v936
        %1010 = vmatpush2.bf16.msra.mxu0 %v935
        %1011 = vmatprep.subr.bf16.mxu0 %v934
        %1012 = vmatpush2.bf16.msra.mxu0 %v933
        %1013 = vmatprep.mubr.bf16.mxu0 %v485
        %1014 = vmatmul.mubr.bf16.gmra.mxu0 %v484
        %v1015 = vpop.f32.mrf.mxu0
        %v1016 = vadd.f32 0.0, %v1015
        %v1017 = vpop.f32.mrf.mxu0
        %v1018 = vadd.f32 0.0, %v1017
        %v1019 = vpop.f32.mrf.mxu0
        %v1020 = vadd.f32 0.0, %v1019
        %v1021 = vpop.f32.mrf.mxu0
        %v1022 = vadd.f32 0.0, %v1021
        %1023 = vmatprep.mubr.bf16.mxu0 %v487
        %1024 = vmatmul.mubr.bf16.gmra.mxu0 %v486
        %v1025 = vpop.f32.mrf.mxu0
        %v1026 = vadd.f32 0.0, %v1025
        %v1027 = vpop.f32.mrf.mxu0
        %v1028 = vadd.f32 0.0, %v1027
        %v1029 = vpop.f32.mrf.mxu0
        %v1030 = vadd.f32 0.0, %v1029
        %v1031 = vpop.f32.mrf.mxu0
        %v1032 = vadd.f32 0.0, %v1031
        %1033 = vmatprep.mubr.bf16.mxu0 %v489
        %1034 = vmatmul.mubr.bf16.gmra.mxu0 %v488
        %v1035 = vpop.f32.mrf.mxu0
        %v1036 = vadd.f32 0.0, %v1035
        %v1037 = vpop.f32.mrf.mxu0
        %v1038 = vadd.f32 0.0, %v1037
        %v1039 = vpop.f32.mrf.mxu0
        %v1040 = vadd.f32 0.0, %v1039
        %v1041 = vpop.f32.mrf.mxu0
        %v1042 = vadd.f32 0.0, %v1041
        %1043 = vmatprep.mubr.bf16.mxu0 %v491
        %1044 = vmatmul.mubr.bf16.gmra.mxu0 %v490
        %v1045 = vpop.f32.mrf.mxu0
        %v1046 = vadd.f32 0.0, %v1045
        %v1047 = vpop.f32.mrf.mxu0
        %v1048 = vadd.f32 0.0, %v1047
        %v1049 = vpop.f32.mrf.mxu0
        %v1050 = vadd.f32 0.0, %v1049
        %v1051 = vpop.f32.mrf.mxu0
        %v1052 = vadd.f32 0.0, %v1051
        %1053 = vmatprep.mubr.bf16.mxu0 %v493
        %1054 = vmatmul.mubr.bf16.gmra.mxu0 %v492
        %v1055 = vpop.f32.mrf.mxu0
        %v1056 = vadd.f32 0.0, %v1055
        %v1057 = vpop.f32.mrf.mxu0
        %v1058 = vadd.f32 0.0, %v1057
        %v1059 = vpop.f32.mrf.mxu0
        %v1060 = vadd.f32 0.0, %v1059
        %v1061 = vpop.f32.mrf.mxu0
        %v1062 = vadd.f32 0.0, %v1061
        %1063 = vmatprep.mubr.bf16.mxu0 %v495
        %1064 = vmatmul.mubr.bf16.gmra.mxu0 %v494
        %v1065 = vpop.f32.mrf.mxu0
        %v1066 = vadd.f32 0.0, %v1065
        %v1067 = vpop.f32.mrf.mxu0
        %v1068 = vadd.f32 0.0, %v1067
        %v1069 = vpop.f32.mrf.mxu0
        %v1070 = vadd.f32 0.0, %v1069
        %v1071 = vpop.f32.mrf.mxu0
        %v1072 = vadd.f32 0.0, %v1071
        %1073 = vmatprep.mubr.bf16.mxu0 %v497
        %1074 = vmatmul.mubr.bf16.gmra.mxu0 %v496
        %v1075 = vpop.f32.mrf.mxu0
        %v1076 = vadd.f32 0.0, %v1075
        %v1077 = vpop.f32.mrf.mxu0
        %v1078 = vadd.f32 0.0, %v1077
        %v1079 = vpop.f32.mrf.mxu0
        %v1080 = vadd.f32 0.0, %v1079
        %v1081 = vpop.f32.mrf.mxu0
        %v1082 = vadd.f32 0.0, %v1081
        %1083 = vmatprep.mubr.bf16.mxu0 %v499
        %1084 = vmatmul.mubr.bf16.gmra.mxu0 %v498
        %v1085 = vpop.f32.mrf.mxu0
        %v1086 = vadd.f32 0.0, %v1085
        %v1087 = vpop.f32.mrf.mxu0
        %v1088 = vadd.f32 0.0, %v1087
        %v1089 = vpop.f32.mrf.mxu0
        %v1090 = vadd.f32 0.0, %v1089
        %v1091 = vpop.f32.mrf.mxu0
        %v1092 = vadd.f32 0.0, %v1091
        %1093 = vdwg.mxu0
        %v1094 = vsub.f32 0.0, %v711
        %v1095 = vsub.f32 0.0, %v713
        %v1096 = vsub.f32 0.0, %v715
        %v1097 = vsub.f32 0.0, %v717
        %v1098 = vsub.f32 0.0, %v721
        %v1099 = vsub.f32 0.0, %v723
        %v1100 = vsub.f32 0.0, %v725
        %v1101 = vsub.f32 0.0, %v727
        %v1102 = vsub.f32 0.0, %v731
        %v1103 = vsub.f32 0.0, %v733
        %v1104 = vsub.f32 0.0, %v735
        %v1105 = vsub.f32 0.0, %v737
        %v1106 = vsub.f32 0.0, %v741
        %v1107 = vsub.f32 0.0, %v743
        %v1108 = vsub.f32 0.0, %v745
        %v1109 = vsub.f32 0.0, %v747
        %v1110 = vsub.f32 0.0, %v751
        %v1111 = vsub.f32 0.0, %v753
        %v1112 = vsub.f32 0.0, %v755
        %v1113 = vsub.f32 0.0, %v757
        %v1114 = vsub.f32 0.0, %v761
        %v1115 = vsub.f32 0.0, %v763
        %v1116 = vsub.f32 0.0, %v765
        %v1117 = vsub.f32 0.0, %v767
        %v1118 = vsub.f32 0.0, %v771
        %v1119 = vsub.f32 0.0, %v773
        %v1120 = vsub.f32 0.0, %v775
        %v1121 = vsub.f32 0.0, %v777
        %v1122 = vsub.f32 0.0, %v781
        %v1123 = vsub.f32 0.0, %v783
        %v1124 = vsub.f32 0.0, %v785
        %v1125 = vsub.f32 0.0, %v787
        %v1126 = vmul.f32 %v1094, 1.442695
        %v1127 = vpow.pop %v1126
        %v1128 = vmul.f32 %v1095, 1.442695
        %v1129 = vpow.pop %v1128
        %v1130 = vmul.f32 %v1096, 1.442695
        %v1131 = vpow.pop %v1130
        %v1132 = vmul.f32 %v1097, 1.442695
        %v1133 = vpow.pop %v1132
        %v1134 = vmul.f32 %v1098, 1.442695
        %v1135 = vpow.pop %v1134
        %v1136 = vmul.f32 %v1099, 1.442695
        %v1137 = vpow.pop %v1136
        %v1138 = vmul.f32 %v1100, 1.442695
        %v1139 = vpow.pop %v1138
        %v1140 = vmul.f32 %v1101, 1.442695
        %v1141 = vpow.pop %v1140
        %v1142 = vmul.f32 %v1102, 1.442695
        %v1143 = vpow.pop %v1142
        %v1144 = vmul.f32 %v1103, 1.442695
        %v1145 = vpow.pop %v1144
        %v1146 = vmul.f32 %v1104, 1.442695
        %v1147 = vpow.pop %v1146
        %v1148 = vmul.f32 %v1105, 1.442695
        %v1149 = vpow.pop %v1148
        %v1150 = vmul.f32 %v1106, 1.442695
        %v1151 = vpow.pop %v1150
        %v1152 = vmul.f32 %v1107, 1.442695
        %v1153 = vpow.pop %v1152
        %v1154 = vmul.f32 %v1108, 1.442695
        %v1155 = vpow.pop %v1154
        %v1156 = vmul.f32 %v1109, 1.442695
        %v1157 = vpow.pop %v1156
        %v1158 = vmul.f32 %v1110, 1.442695
        %v1159 = vpow.pop %v1158
        %v1160 = vmul.f32 %v1111, 1.442695
        %v1161 = vpow.pop %v1160
        %v1162 = vmul.f32 %v1112, 1.442695
        %v1163 = vpow.pop %v1162
        %v1164 = vmul.f32 %v1113, 1.442695
        %v1165 = vpow.pop %v1164
        %v1166 = vmul.f32 %v1114, 1.442695
        %v1167 = vpow.pop %v1166
        %v1168 = vmul.f32 %v1115, 1.442695
        %v1169 = vpow.pop %v1168
        %v1170 = vmul.f32 %v1116, 1.442695
        %v1171 = vpow.pop %v1170
        %v1172 = vmul.f32 %v1117, 1.442695
        %v1173 = vpow.pop %v1172
        %v1174 = vmul.f32 %v1118, 1.442695
        %v1175 = vpow.pop %v1174
        %v1176 = vmul.f32 %v1119, 1.442695
        %v1177 = vpow.pop %v1176
        %v1178 = vmul.f32 %v1120, 1.442695
        %v1179 = vpow.pop %v1178
        %v1180 = vmul.f32 %v1121, 1.442695
        %v1181 = vpow.pop %v1180
        %v1182 = vmul.f32 %v1122, 1.442695
        %v1183 = vpow.pop %v1182
        %v1184 = vmul.f32 %v1123, 1.442695
        %v1185 = vpow.pop %v1184
        %v1186 = vmul.f32 %v1124, 1.442695
        %v1187 = vpow.pop %v1186
        %v1188 = vmul.f32 %v1125, 1.442695
        %v1189 = vpow.pop %v1188
        %v1190 = vadd.f32 %v1127, 1.0
        %v1191 = vadd.f32 %v1129, 1.0
        %v1192 = vadd.f32 %v1131, 1.0
        %v1193 = vadd.f32 %v1133, 1.0
        %v1194 = vadd.f32 %v1135, 1.0
        %v1195 = vadd.f32 %v1137, 1.0
        %v1196 = vadd.f32 %v1139, 1.0
        %v1197 = vadd.f32 %v1141, 1.0
        %v1198 = vadd.f32 %v1143, 1.0
        %v1199 = vadd.f32 %v1145, 1.0
        %v1200 = vadd.f32 %v1147, 1.0
        %v1201 = vadd.f32 %v1149, 1.0
        %v1202 = vadd.f32 %v1151, 1.0
        %v1203 = vadd.f32 %v1153, 1.0
        %v1204 = vadd.f32 %v1155, 1.0
        %v1205 = vadd.f32 %v1157, 1.0
        %v1206 = vadd.f32 %v1159, 1.0
        %v1207 = vadd.f32 %v1161, 1.0
        %v1208 = vadd.f32 %v1163, 1.0
        %v1209 = vadd.f32 %v1165, 1.0
        %v1210 = vadd.f32 %v1167, 1.0
        %v1211 = vadd.f32 %v1169, 1.0
        %v1212 = vadd.f32 %v1171, 1.0
        %v1213 = vadd.f32 %v1173, 1.0
        %v1214 = vadd.f32 %v1175, 1.0
        %v1215 = vadd.f32 %v1177, 1.0
        %v1216 = vadd.f32 %v1179, 1.0
        %v1217 = vadd.f32 %v1181, 1.0
        %v1218 = vadd.f32 %v1183, 1.0
        %v1219 = vadd.f32 %v1185, 1.0
        %v1220 = vadd.f32 %v1187, 1.0
        %v1221 = vadd.f32 %v1189, 1.0
        %v1222 = vrcp.pop %v1190
        %v1223 = vrcp.pop %v1191
        %v1224 = vrcp.pop %v1192
        %v1225 = vrcp.pop %v1193
        %v1226 = vrcp.pop %v1194
        %v1227 = vrcp.pop %v1195
        %v1228 = vrcp.pop %v1196
        %v1229 = vrcp.pop %v1197
        %v1230 = vrcp.pop %v1198
        %v1231 = vrcp.pop %v1199
        %v1232 = vrcp.pop %v1200
        %v1233 = vrcp.pop %v1201
        %v1234 = vrcp.pop %v1202
        %v1235 = vrcp.pop %v1203
        %v1236 = vrcp.pop %v1204
        %v1237 = vrcp.pop %v1205
        %v1238 = vrcp.pop %v1206
        %v1239 = vrcp.pop %v1207
        %v1240 = vrcp.pop %v1208
        %v1241 = vrcp.pop %v1209
        %v1242 = vrcp.pop %v1210
        %v1243 = vrcp.pop %v1211
        %v1244 = vrcp.pop %v1212
        %v1245 = vrcp.pop %v1213
        %v1246 = vrcp.pop %v1214
        %v1247 = vrcp.pop %v1215
        %v1248 = vrcp.pop %v1216
        %v1249 = vrcp.pop %v1217
        %v1250 = vrcp.pop %v1218
        %v1251 = vrcp.pop %v1219
        %v1252 = vrcp.pop %v1220
        %v1253 = vrcp.pop %v1221
        %v1254 = vmul.f32 %v711, %v1222
        %v1255 = vmul.f32 %v713, %v1223
        %v1256 = vmul.f32 %v715, %v1224
        %v1257 = vmul.f32 %v717, %v1225
        %v1258 = vmul.f32 %v721, %v1226
        %v1259 = vmul.f32 %v723, %v1227
        %v1260 = vmul.f32 %v725, %v1228
        %v1261 = vmul.f32 %v727, %v1229
        %v1262 = vmul.f32 %v731, %v1230
        %v1263 = vmul.f32 %v733, %v1231
        %v1264 = vmul.f32 %v735, %v1232
        %v1265 = vmul.f32 %v737, %v1233
        %v1266 = vmul.f32 %v741, %v1234
        %v1267 = vmul.f32 %v743, %v1235
        %v1268 = vmul.f32 %v745, %v1236
        %v1269 = vmul.f32 %v747, %v1237
        %v1270 = vmul.f32 %v751, %v1238
        %v1271 = vmul.f32 %v753, %v1239
        %v1272 = vmul.f32 %v755, %v1240
        %v1273 = vmul.f32 %v757, %v1241
        %v1274 = vmul.f32 %v761, %v1242
        %v1275 = vmul.f32 %v763, %v1243
        %v1276 = vmul.f32 %v765, %v1244
        %v1277 = vmul.f32 %v767, %v1245
        %v1278 = vmul.f32 %v771, %v1246
        %v1279 = vmul.f32 %v773, %v1247
        %v1280 = vmul.f32 %v775, %v1248
        %v1281 = vmul.f32 %v777, %v1249
        %v1282 = vmul.f32 %v781, %v1250
        %v1283 = vmul.f32 %v783, %v1251
        %v1284 = vmul.f32 %v785, %v1252
        %v1285 = vmul.f32 %v787, %v1253
        %v1286 = vmul.f32 %v1254, %v1016
        %v1287 = vmul.f32 %v1255, %v1018
        %v1288 = vmul.f32 %v1256, %v1020
        %v1289 = vmul.f32 %v1257, %v1022
        %v1290 = vmul.f32 %v1258, %v1026
        %v1291 = vmul.f32 %v1259, %v1028
        %v1292 = vmul.f32 %v1260, %v1030
        %v1293 = vmul.f32 %v1261, %v1032
        %v1294 = vmul.f32 %v1262, %v1036
        %v1295 = vmul.f32 %v1263, %v1038
        %v1296 = vmul.f32 %v1264, %v1040
        %v1297 = vmul.f32 %v1265, %v1042
        %v1298 = vmul.f32 %v1266, %v1046
        %v1299 = vmul.f32 %v1267, %v1048
        %v1300 = vmul.f32 %v1268, %v1050
        %v1301 = vmul.f32 %v1269, %v1052
        %v1302 = vmul.f32 %v1270, %v1056
        %v1303 = vmul.f32 %v1271, %v1058
        %v1304 = vmul.f32 %v1272, %v1060
        %v1305 = vmul.f32 %v1273, %v1062
        %v1306 = vmul.f32 %v1274, %v1066
        %v1307 = vmul.f32 %v1275, %v1068
        %v1308 = vmul.f32 %v1276, %v1070
        %v1309 = vmul.f32 %v1277, %v1072
        %v1310 = vmul.f32 %v1278, %v1076
        %v1311 = vmul.f32 %v1279, %v1078
        %v1312 = vmul.f32 %v1280, %v1080
        %v1313 = vmul.f32 %v1281, %v1082
        %v1314 = vmul.f32 %v1282, %v1086
        %v1315 = vmul.f32 %v1283, %v1088
        %v1316 = vmul.f32 %v1284, %v1090
        %v1317 = vmul.f32 %v1285, %v1092
        %v1318 = vpack.c.bf16 %v1288, %v1286
        %v1319 = vpack.c.bf16 %v1289, %v1287
        %v1320 = vpack.c.bf16 %v1292, %v1290
        %v1321 = vpack.c.bf16 %v1293, %v1291
        %v1322 = vpack.c.bf16 %v1296, %v1294
        %v1323 = vpack.c.bf16 %v1297, %v1295
        %v1324 = vpack.c.bf16 %v1300, %v1298
        %v1325 = vpack.c.bf16 %v1301, %v1299
        %v1326 = vpack.c.bf16 %v1304, %v1302
        %v1327 = vpack.c.bf16 %v1305, %v1303
        %v1328 = vpack.c.bf16 %v1308, %v1306
        %v1329 = vpack.c.bf16 %v1309, %v1307
        %v1330 = vpack.c.bf16 %v1312, %v1310
        %v1331 = vpack.c.bf16 %v1313, %v1311
        %v1332 = vpack.c.bf16 %v1316, %v1314
        %v1333 = vpack.c.bf16 %v1317, %v1315
        %v1334 = vld [vmem:[#allocation2] sm:$0xff]
        %v1335 = vld [vmem:[#allocation2 + $0x8] sm:$0xff]
        %v1336 = vld [vmem:[#allocation2 + $0x10] sm:$0xff]
        %v1337 = vld [vmem:[#allocation2 + $0x18] sm:$0xff]
        %v1338 = vld [vmem:[#allocation2 + $0x20] sm:$0xff]
        %v1339 = vld [vmem:[#allocation2 + $0x28] sm:$0xff]
        %v1340 = vld [vmem:[#allocation2 + $0x30] sm:$0xff]
        %v1341 = vld [vmem:[#allocation2 + $0x38] sm:$0xff]
        %v1342 = vld [vmem:[#allocation2 + $0x40] sm:$0xff]
        %v1343 = vld [vmem:[#allocation2 + $0x48] sm:$0xff]
        %v1344 = vld [vmem:[#allocation2 + $0x50] sm:$0xff]
        %v1345 = vld [vmem:[#allocation2 + $0x58] sm:$0xff]
        %v1346 = vld [vmem:[#allocation2 + $0x60] sm:$0xff]
        %v1347 = vld [vmem:[#allocation2 + $0x68] sm:$0xff]
        %v1348 = vld [vmem:[#allocation2 + $0x70] sm:$0xff]
        %v1349 = vld [vmem:[#allocation2 + $0x78] sm:$0xff]
        %v1350 = vld [vmem:[#allocation2 + $0x80] sm:$0xff]
        %v1351 = vld [vmem:[#allocation2 + $0x88] sm:$0xff]
        %v1352 = vld [vmem:[#allocation2 + $0x90] sm:$0xff]
        %v1353 = vld [vmem:[#allocation2 + $0x98] sm:$0xff]
        %v1354 = vld [vmem:[#allocation2 + $0xa0] sm:$0xff]
        %v1355 = vld [vmem:[#allocation2 + $0xa8] sm:$0xff]
        %v1356 = vld [vmem:[#allocation2 + $0xb0] sm:$0xff]
        %v1357 = vld [vmem:[#allocation2 + $0xb8] sm:$0xff]
        %v1358 = vld [vmem:[#allocation2 + $0xc0] sm:$0xff]
        %v1359 = vld [vmem:[#allocation2 + $0xc8] sm:$0xff]
        %v1360 = vld [vmem:[#allocation2 + $0xd0] sm:$0xff]
        %v1361 = vld [vmem:[#allocation2 + $0xd8] sm:$0xff]
        %v1362 = vld [vmem:[#allocation2 + $0xe0] sm:$0xff]
        %v1363 = vld [vmem:[#allocation2 + $0xe8] sm:$0xff]
        %v1364 = vld [vmem:[#allocation2 + $0xf0] sm:$0xff]
        %v1365 = vld [vmem:[#allocation2 + $0xf8] sm:$0xff]
        %v1366 = vld [vmem:[%s307] sm:$0xff]
        %v1367 = vld [vmem:[%s307 + $0x8] sm:$0xff]
        %v1368 = vld [vmem:[%s307 + $0x10] sm:$0xff]
        %v1369 = vld [vmem:[%s307 + $0x18] sm:$0xff]
        %v1370 = vld [vmem:[%s307 + $0x20] sm:$0xff]
        %v1371 = vld [vmem:[%s307 + $0x28] sm:$0xff]
        %v1372 = vld [vmem:[%s307 + $0x30] sm:$0xff]
        %v1373 = vld [vmem:[%s307 + $0x38] sm:$0xff]
        %v1374 = vld [vmem:[%s307 + $0x40] sm:$0xff]
        %v1375 = vld [vmem:[%s307 + $0x48] sm:$0xff]
        %v1376 = vld [vmem:[%s307 + $0x50] sm:$0xff]
        %v1377 = vld [vmem:[%s307 + $0x58] sm:$0xff]
        %v1378 = vld [vmem:[%s307 + $0x60] sm:$0xff]
        %v1379 = vld [vmem:[%s307 + $0x68] sm:$0xff]
        %v1380 = vld [vmem:[%s307 + $0x70] sm:$0xff]
        %v1381 = vld [vmem:[%s307 + $0x78] sm:$0xff]
        %v1382 = vld [vmem:[%s307 + $0x80] sm:$0xff]
        %v1383 = vld [vmem:[%s307 + $0x88] sm:$0xff]
        %v1384 = vld [vmem:[%s307 + $0x90] sm:$0xff]
        %v1385 = vld [vmem:[%s307 + $0x98] sm:$0xff]
        %v1386 = vld [vmem:[%s307 + $0xa0] sm:$0xff]
        %v1387 = vld [vmem:[%s307 + $0xa8] sm:$0xff]
        %v1388 = vld [vmem:[%s307 + $0xb0] sm:$0xff]
        %v1389 = vld [vmem:[%s307 + $0xb8] sm:$0xff]
        %v1390 = vld [vmem:[%s307 + $0xc0] sm:$0xff]
        %v1391 = vld [vmem:[%s307 + $0xc8] sm:$0xff]
        %v1392 = vld [vmem:[%s307 + $0xd0] sm:$0xff]
        %v1393 = vld [vmem:[%s307 + $0xd8] sm:$0xff]
        %v1394 = vld [vmem:[%s307 + $0xe0] sm:$0xff]
        %v1395 = vld [vmem:[%s307 + $0xe8] sm:$0xff]
        %v1396 = vld [vmem:[%s307 + $0xf0] sm:$0xff]
        %v1397 = vld [vmem:[%s307 + $0xf8] sm:$0xff]
        %v1430 = vunpack.c.l.b16 %v1366
        %v1431 = vunpack.c.h.b16 %v1366
        %v1432 = vunpack.c.l.b16 %v1367
        %v1433 = vunpack.c.h.b16 %v1367
        %v1434 = vunpack.c.l.b16 %v1368
        %v1435 = vunpack.c.h.b16 %v1368
        %v1436 = vunpack.c.l.b16 %v1369
        %v1437 = vunpack.c.h.b16 %v1369
        %v1438 = vunpack.c.l.b16 %v1370
        %v1439 = vunpack.c.h.b16 %v1370
        %v1440 = vunpack.c.l.b16 %v1371
        %v1441 = vunpack.c.h.b16 %v1371
        %v1442 = vunpack.c.l.b16 %v1372
        %v1443 = vunpack.c.h.b16 %v1372
        %v1444 = vunpack.c.l.b16 %v1373
        %v1445 = vunpack.c.h.b16 %v1373
        %v1446 = vunpack.c.l.b16 %v1374
        %v1447 = vunpack.c.h.b16 %v1374
        %v1448 = vunpack.c.l.b16 %v1375
        %v1449 = vunpack.c.h.b16 %v1375
        %v1450 = vunpack.c.l.b16 %v1376
        %v1451 = vunpack.c.h.b16 %v1376
        %v1452 = vunpack.c.l.b16 %v1377
        %v1453 = vunpack.c.h.b16 %v1377
        %v1454 = vunpack.c.l.b16 %v1378
        %v1455 = vunpack.c.h.b16 %v1378
        %v1456 = vunpack.c.l.b16 %v1379
        %v1457 = vunpack.c.h.b16 %v1379
        %v1458 = vunpack.c.l.b16 %v1380
        %v1459 = vunpack.c.h.b16 %v1380
        %v1460 = vunpack.c.l.b16 %v1381
        %v1461 = vunpack.c.h.b16 %v1381
        %v1462 = vunpack.c.l.b16 %v1382
        %v1463 = vunpack.c.h.b16 %v1382
        %v1464 = vunpack.c.l.b16 %v1383
        %v1465 = vunpack.c.h.b16 %v1383
        %v1466 = vunpack.c.l.b16 %v1384
        %v1467 = vunpack.c.h.b16 %v1384
        %v1468 = vunpack.c.l.b16 %v1385
        %v1469 = vunpack.c.h.b16 %v1385
        %v1470 = vunpack.c.l.b16 %v1386
        %v1471 = vunpack.c.h.b16 %v1386
        %v1472 = vunpack.c.l.b16 %v1387
        %v1473 = vunpack.c.h.b16 %v1387
        %v1474 = vunpack.c.l.b16 %v1388
        %v1475 = vunpack.c.h.b16 %v1388
        %v1476 = vunpack.c.l.b16 %v1389
        %v1477 = vunpack.c.h.b16 %v1389
        %v1478 = vunpack.c.l.b16 %v1390
        %v1479 = vunpack.c.h.b16 %v1390
        %v1480 = vunpack.c.l.b16 %v1391
        %v1481 = vunpack.c.h.b16 %v1391
        %v1482 = vunpack.c.l.b16 %v1392
        %v1483 = vunpack.c.h.b16 %v1392
        %v1484 = vunpack.c.l.b16 %v1393
        %v1485 = vunpack.c.h.b16 %v1393
        %v1486 = vunpack.c.l.b16 %v1394
        %v1487 = vunpack.c.h.b16 %v1394
        %v1488 = vunpack.c.l.b16 %v1395
        %v1489 = vunpack.c.h.b16 %v1395
        %v1490 = vunpack.c.l.b16 %v1396
        %v1491 = vunpack.c.h.b16 %v1396
        %v1492 = vunpack.c.l.b16 %v1397
        %v1493 = vunpack.c.h.b16 %v1397
        %v1494 = vpack.c.b16 %v1432, %v1430
        %v1495 = vpack.c.b16 %v1433, %v1431
        %v1496 = vpack.c.b16 %v1436, %v1434
        %v1497 = vpack.c.b16 %v1437, %v1435
        %v1498 = vpack.c.b16 %v1440, %v1438
        %v1499 = vpack.c.b16 %v1441, %v1439
        %v1500 = vpack.c.b16 %v1444, %v1442
        %v1501 = vpack.c.b16 %v1445, %v1443
        %v1502 = vpack.c.b16 %v1448, %v1446
        %v1503 = vpack.c.b16 %v1449, %v1447
        %v1504 = vpack.c.b16 %v1452, %v1450
        %v1505 = vpack.c.b16 %v1453, %v1451
        %v1506 = vpack.c.b16 %v1456, %v1454
        %v1507 = vpack.c.b16 %v1457, %v1455
        %v1508 = vpack.c.b16 %v1460, %v1458
        %v1509 = vpack.c.b16 %v1461, %v1459
        %v1510 = vpack.c.b16 %v1464, %v1462
        %v1511 = vpack.c.b16 %v1465, %v1463
        %v1512 = vpack.c.b16 %v1468, %v1466
        %v1513 = vpack.c.b16 %v1469, %v1467
        %v1514 = vpack.c.b16 %v1472, %v1470
        %v1515 = vpack.c.b16 %v1473, %v1471
        %v1516 = vpack.c.b16 %v1476, %v1474
        %v1517 = vpack.c.b16 %v1477, %v1475
        %v1518 = vpack.c.b16 %v1480, %v1478
        %v1519 = vpack.c.b16 %v1481, %v1479
        %v1520 = vpack.c.b16 %v1484, %v1482
        %v1521 = vpack.c.b16 %v1485, %v1483
        %v1522 = vpack.c.b16 %v1488, %v1486
        %v1523 = vpack.c.b16 %v1489, %v1487
        %v1524 = vpack.c.b16 %v1492, %v1490
        %v1525 = vpack.c.b16 %v1493, %v1491
        %1558 = vmatprep.subr.bf16.mxu0 %v1509
        %1559 = vmatpush1.bf16.msra.mxu0 %v1508
        %1560 = vmatprep.subr.bf16.mxu0 %v1507
        %1561 = vmatpush1.bf16.msra.mxu0 %v1506
        %1562 = vmatprep.subr.bf16.mxu0 %v1505
        %1563 = vmatpush1.bf16.msra.mxu0 %v1504
        %1564 = vmatprep.subr.bf16.mxu0 %v1503
        %1565 = vmatpush1.bf16.msra.mxu0 %v1502
        %1566 = vmatprep.subr.bf16.mxu0 %v1501
        %1567 = vmatpush1.bf16.msra.mxu0 %v1500
        %1568 = vmatprep.subr.bf16.mxu0 %v1499
        %1569 = vmatpush1.bf16.msra.mxu0 %v1498
        %1570 = vmatprep.subr.bf16.mxu0 %v1497
        %1571 = vmatpush1.bf16.msra.mxu0 %v1496
        %1572 = vmatprep.subr.bf16.mxu0 %v1495
        %1573 = vmatpush1.bf16.msra.mxu0 %v1494
        %1574 = vmatprep.subr.bf16.mxu0 %v1525
        %1575 = vmatpush2.bf16.msra.mxu0 %v1524
        %1576 = vmatprep.subr.bf16.mxu0 %v1523
        %1577 = vmatpush2.bf16.msra.mxu0 %v1522
        %1578 = vmatprep.subr.bf16.mxu0 %v1521
        %1579 = vmatpush2.bf16.msra.mxu0 %v1520
        %1580 = vmatprep.subr.bf16.mxu0 %v1519
        %1581 = vmatpush2.bf16.msra.mxu0 %v1518
        %1582 = vmatprep.subr.bf16.mxu0 %v1517
        %1583 = vmatpush2.bf16.msra.mxu0 %v1516
        %1584 = vmatprep.subr.bf16.mxu0 %v1515
        %1585 = vmatpush2.bf16.msra.mxu0 %v1514
        %1586 = vmatprep.subr.bf16.mxu0 %v1513
        %1587 = vmatpush2.bf16.msra.mxu0 %v1512
        %1588 = vmatprep.subr.bf16.mxu0 %v1511
        %1589 = vmatpush2.bf16.msra.mxu0 %v1510
        %1590 = vmatprep.mubr.bf16.mxu0 %v1319
        %1591 = vmatmul.mubr.bf16.gmra.mxu0 %v1318
        %v1592 = vpop.f32.mrf.mxu0
        %v1593 = vadd.f32 0.0, %v1592
        %v1594 = vpop.f32.mrf.mxu0
        %v1595 = vadd.f32 0.0, %v1594
        %v1596 = vpop.f32.mrf.mxu0
        %v1597 = vadd.f32 0.0, %v1596
        %v1598 = vpop.f32.mrf.mxu0
        %v1599 = vadd.f32 0.0, %v1598
        %1600 = vmatprep.mubr.bf16.mxu0 %v1321
        %1601 = vmatmul.mubr.bf16.gmra.mxu0 %v1320
        %v1602 = vpop.f32.mrf.mxu0
        %v1603 = vadd.f32 0.0, %v1602
        %v1604 = vpop.f32.mrf.mxu0
        %v1605 = vadd.f32 0.0, %v1604
        %v1606 = vpop.f32.mrf.mxu0
        %v1607 = vadd.f32 0.0, %v1606
        %v1608 = vpop.f32.mrf.mxu0
        %v1609 = vadd.f32 0.0, %v1608
        %1610 = vmatprep.mubr.bf16.mxu0 %v1323
        %1611 = vmatmul.mubr.bf16.gmra.mxu0 %v1322
        %v1612 = vpop.f32.mrf.mxu0
        %v1613 = vadd.f32 0.0, %v1612
        %v1614 = vpop.f32.mrf.mxu0
        %v1615 = vadd.f32 0.0, %v1614
        %v1616 = vpop.f32.mrf.mxu0
        %v1617 = vadd.f32 0.0, %v1616
        %v1618 = vpop.f32.mrf.mxu0
        %v1619 = vadd.f32 0.0, %v1618
        %1620 = vmatprep.mubr.bf16.mxu0 %v1325
        %1621 = vmatmul.mubr.bf16.gmra.mxu0 %v1324
        %v1622 = vpop.f32.mrf.mxu0
        %v1623 = vadd.f32 0.0, %v1622
        %v1624 = vpop.f32.mrf.mxu0
        %v1625 = vadd.f32 0.0, %v1624
        %v1626 = vpop.f32.mrf.mxu0
        %v1627 = vadd.f32 0.0, %v1626
        %v1628 = vpop.f32.mrf.mxu0
        %v1629 = vadd.f32 0.0, %v1628
        %1630 = vmatprep.mubr.bf16.mxu0 %v1327
        %1631 = vmatmul.mubr.bf16.gmra.mxu0 %v1326
        %v1632 = vpop.f32.mrf.mxu0
        %v1633 = vadd.f32 0.0, %v1632
        %v1634 = vpop.f32.mrf.mxu0
        %v1635 = vadd.f32 0.0, %v1634
        %v1636 = vpop.f32.mrf.mxu0
        %v1637 = vadd.f32 0.0, %v1636
        %v1638 = vpop.f32.mrf.mxu0
        %v1639 = vadd.f32 0.0, %v1638
        %1640 = vmatprep.mubr.bf16.mxu0 %v1329
        %1641 = vmatmul.mubr.bf16.gmra.mxu0 %v1328
        %v1642 = vpop.f32.mrf.mxu0
        %v1643 = vadd.f32 0.0, %v1642
        %v1644 = vpop.f32.mrf.mxu0
        %v1645 = vadd.f32 0.0, %v1644
        %v1646 = vpop.f32.mrf.mxu0
        %v1647 = vadd.f32 0.0, %v1646
        %v1648 = vpop.f32.mrf.mxu0
        %v1649 = vadd.f32 0.0, %v1648
        %1650 = vmatprep.mubr.bf16.mxu0 %v1331
        %1651 = vmatmul.mubr.bf16.gmra.mxu0 %v1330
        %v1652 = vpop.f32.mrf.mxu0
        %v1653 = vadd.f32 0.0, %v1652
        %v1654 = vpop.f32.mrf.mxu0
        %v1655 = vadd.f32 0.0, %v1654
        %v1656 = vpop.f32.mrf.mxu0
        %v1657 = vadd.f32 0.0, %v1656
        %v1658 = vpop.f32.mrf.mxu0
        %v1659 = vadd.f32 0.0, %v1658
        %1660 = vmatprep.mubr.bf16.mxu0 %v1333
        %1661 = vmatmul.mubr.bf16.gmra.mxu0 %v1332
        %v1662 = vpop.f32.mrf.mxu0
        %v1663 = vadd.f32 0.0, %v1662
        %v1664 = vpop.f32.mrf.mxu0
        %v1665 = vadd.f32 0.0, %v1664
        %v1666 = vpop.f32.mrf.mxu0
        %v1667 = vadd.f32 0.0, %v1666
        %v1668 = vpop.f32.mrf.mxu0
        %v1669 = vadd.f32 0.0, %v1668
        %1670 = vdwg.mxu0
        %v1671 = vadd.f32 %v1334, %v1593
        %v1672 = vadd.f32 %v1335, %v1595
        %v1673 = vadd.f32 %v1336, %v1597
        %v1674 = vadd.f32 %v1337, %v1599
        %v1675 = vadd.f32 %v1338, %v1603
        %v1676 = vadd.f32 %v1339, %v1605
        %v1677 = vadd.f32 %v1340, %v1607
        %v1678 = vadd.f32 %v1341, %v1609
        %v1679 = vadd.f32 %v1342, %v1613
        %v1680 = vadd.f32 %v1343, %v1615
        %v1681 = vadd.f32 %v1344, %v1617
        %v1682 = vadd.f32 %v1345, %v1619
        %v1683 = vadd.f32 %v1346, %v1623
        %v1684 = vadd.f32 %v1347, %v1625
        %v1685 = vadd.f32 %v1348, %v1627
        %v1686 = vadd.f32 %v1349, %v1629
        %v1687 = vadd.f32 %v1350, %v1633
        %v1688 = vadd.f32 %v1351, %v1635
        %v1689 = vadd.f32 %v1352, %v1637
        %v1690 = vadd.f32 %v1353, %v1639
        %v1691 = vadd.f32 %v1354, %v1643
        %v1692 = vadd.f32 %v1355, %v1645
        %v1693 = vadd.f32 %v1356, %v1647
        %v1694 = vadd.f32 %v1357, %v1649
        %v1695 = vadd.f32 %v1358, %v1653
        %v1696 = vadd.f32 %v1359, %v1655
        %v1697 = vadd.f32 %v1360, %v1657
        %v1698 = vadd.f32 %v1361, %v1659
        %v1699 = vadd.f32 %v1362, %v1663
        %v1700 = vadd.f32 %v1363, %v1665
        %v1701 = vadd.f32 %v1364, %v1667
        %v1702 = vadd.f32 %v1365, %v1669
        %1703 = vst [vmem:[#allocation2] sm:$0xff] %v1671
        %1704 = vst [vmem:[#allocation2 + $0x8] sm:$0xff] %v1672
        %1705 = vst [vmem:[#allocation2 + $0x10] sm:$0xff] %v1673
        %1706 = vst [vmem:[#allocation2 + $0x18] sm:$0xff] %v1674
        %1707 = vst [vmem:[#allocation2 + $0x20] sm:$0xff] %v1675
        %1708 = vst [vmem:[#allocation2 + $0x28] sm:$0xff] %v1676
        %1709 = vst [vmem:[#allocation2 + $0x30] sm:$0xff] %v1677
        %1710 = vst [vmem:[#allocation2 + $0x38] sm:$0xff] %v1678
        %1711 = vst [vmem:[#allocation2 + $0x40] sm:$0xff] %v1679
        %1712 = vst [vmem:[#allocation2 + $0x48] sm:$0xff] %v1680
        %1713 = vst [vmem:[#allocation2 + $0x50] sm:$0xff] %v1681
        %1714 = vst [vmem:[#allocation2 + $0x58] sm:$0xff] %v1682
        %1715 = vst [vmem:[#allocation2 + $0x60] sm:$0xff] %v1683
        %1716 = vst [vmem:[#allocation2 + $0x68] sm:$0xff] %v1684
        %1717 = vst [vmem:[#allocation2 + $0x70] sm:$0xff] %v1685
        %1718 = vst [vmem:[#allocation2 + $0x78] sm:$0xff] %v1686
        %1719 = vst [vmem:[#allocation2 + $0x80] sm:$0xff] %v1687
        %1720 = vst [vmem:[#allocation2 + $0x88] sm:$0xff] %v1688
        %1721 = vst [vmem:[#allocation2 + $0x90] sm:$0xff] %v1689
        %1722 = vst [vmem:[#allocation2 + $0x98] sm:$0xff] %v1690
        %1723 = vst [vmem:[#allocation2 + $0xa0] sm:$0xff] %v1691
        %1724 = vst [vmem:[#allocation2 + $0xa8] sm:$0xff] %v1692
        %1725 = vst [vmem:[#allocation2 + $0xb0] sm:$0xff] %v1693
        %1726 = vst [vmem:[#allocation2 + $0xb8] sm:$0xff] %v1694
        %1727 = vst [vmem:[#allocation2 + $0xc0] sm:$0xff] %v1695
        %1728 = vst [vmem:[#allocation2 + $0xc8] sm:$0xff] %v1696
        %1729 = vst [vmem:[#allocation2 + $0xd0] sm:$0xff] %v1697
        %1730 = vst [vmem:[#allocation2 + $0xd8] sm:$0xff] %v1698
        %1731 = vst [vmem:[#allocation2 + $0xe0] sm:$0xff] %v1699
        %1732 = vst [vmem:[#allocation2 + $0xe8] sm:$0xff] %v1700
        %1733 = vst [vmem:[#allocation2 + $0xf0] sm:$0xff] %v1701
        %1734 = vst [vmem:[#allocation2 + $0xf8] sm:$0xff] %v1702
        %p1735 = scmp.eq.s32.totalorder %s32, 3
        // Predicated region
        $region57: #{tpu_custom_call.1} parent=35 // pred_check
          %p1736 = pneg %p1735
        $region58: #{tpu_custom_call.1} parent=35 // pred_check_branch
          %1738 = sbr.rel (%p1736) target = $region60
        $region59: #{tpu_custom_call.1} parent=35 // pred_region
          %v1739 = vld [vmem:[#allocation2] sm:$0xff]
          %v1740 = vld [vmem:[#allocation2 + $0x8] sm:$0xff]
          %v1741 = vld [vmem:[#allocation2 + $0x10] sm:$0xff]
          %v1742 = vld [vmem:[#allocation2 + $0x18] sm:$0xff]
          %v1743 = vld [vmem:[#allocation2 + $0x20] sm:$0xff]
          %v1744 = vld [vmem:[#allocation2 + $0x28] sm:$0xff]
          %v1745 = vld [vmem:[#allocation2 + $0x30] sm:$0xff]
          %v1746 = vld [vmem:[#allocation2 + $0x38] sm:$0xff]
          %v1747 = vld [vmem:[#allocation2 + $0x40] sm:$0xff]
          %v1748 = vld [vmem:[#allocation2 + $0x48] sm:$0xff]
          %v1749 = vld [vmem:[#allocation2 + $0x50] sm:$0xff]
          %v1750 = vld [vmem:[#allocation2 + $0x58] sm:$0xff]
          %v1751 = vld [vmem:[#allocation2 + $0x60] sm:$0xff]
          %v1752 = vld [vmem:[#allocation2 + $0x68] sm:$0xff]
          %v1753 = vld [vmem:[#allocation2 + $0x70] sm:$0xff]
          %v1754 = vld [vmem:[#allocation2 + $0x78] sm:$0xff]
          %v1755 = vld [vmem:[#allocation2 + $0x80] sm:$0xff]
          %v1756 = vld [vmem:[#allocation2 + $0x88] sm:$0xff]
          %v1757 = vld [vmem:[#allocation2 + $0x90] sm:$0xff]
          %v1758 = vld [vmem:[#allocation2 + $0x98] sm:$0xff]
          %v1759 = vld [vmem:[#allocation2 + $0xa0] sm:$0xff]
          %v1760 = vld [vmem:[#allocation2 + $0xa8] sm:$0xff]
          %v1761 = vld [vmem:[#allocation2 + $0xb0] sm:$0xff]
          %v1762 = vld [vmem:[#allocation2 + $0xb8] sm:$0xff]
          %v1763 = vld [vmem:[#allocation2 + $0xc0] sm:$0xff]
          %v1764 = vld [vmem:[#allocation2 + $0xc8] sm:$0xff]
          %v1765 = vld [vmem:[#allocation2 + $0xd0] sm:$0xff]
          %v1766 = vld [vmem:[#allocation2 + $0xd8] sm:$0xff]
          %v1767 = vld [vmem:[#allocation2 + $0xe0] sm:$0xff]
          %v1768 = vld [vmem:[#allocation2 + $0xe8] sm:$0xff]
          %v1769 = vld [vmem:[#allocation2 + $0xf0] sm:$0xff]
          %v1770 = vld [vmem:[#allocation2 + $0xf8] sm:$0xff]
          %v1771 = vpack.c.bf16 %v1741, %v1739
          %v1772 = vpack.c.bf16 %v1742, %v1740
          %v1773 = vpack.c.bf16 %v1745, %v1743
          %v1774 = vpack.c.bf16 %v1746, %v1744
          %v1775 = vpack.c.bf16 %v1749, %v1747
          %v1776 = vpack.c.bf16 %v1750, %v1748
          %v1777 = vpack.c.bf16 %v1753, %v1751
          %v1778 = vpack.c.bf16 %v1754, %v1752
          %v1779 = vpack.c.bf16 %v1757, %v1755
          %v1780 = vpack.c.bf16 %v1758, %v1756
          %v1781 = vpack.c.bf16 %v1761, %v1759
          %v1782 = vpack.c.bf16 %v1762, %v1760
          %v1783 = vpack.c.bf16 %v1765, %v1763
          %v1784 = vpack.c.bf16 %v1766, %v1764
          %v1785 = vpack.c.bf16 %v1769, %v1767
          %v1786 = vpack.c.bf16 %v1770, %v1768
          %v1803 = vunpack.c.l.b16 %v1771
          %v1804 = vunpack.c.l.b16 %v1772
          %v1805 = vunpack.c.h.b16 %v1771
          %v1806 = vunpack.c.h.b16 %v1772
          %v1807 = vunpack.c.l.b16 %v1773
          %v1808 = vunpack.c.l.b16 %v1774
          %v1809 = vunpack.c.h.b16 %v1773
          %v1810 = vunpack.c.h.b16 %v1774
          %v1811 = vunpack.c.l.b16 %v1775
          %v1812 = vunpack.c.l.b16 %v1776
          %v1813 = vunpack.c.h.b16 %v1775
          %v1814 = vunpack.c.h.b16 %v1776
          %v1815 = vunpack.c.l.b16 %v1777
          %v1816 = vunpack.c.l.b16 %v1778
          %v1817 = vunpack.c.h.b16 %v1777
          %v1818 = vunpack.c.h.b16 %v1778
          %v1819 = vunpack.c.l.b16 %v1779
          %v1820 = vunpack.c.l.b16 %v1780
          %v1821 = vunpack.c.h.b16 %v1779
          %v1822 = vunpack.c.h.b16 %v1780
          %v1823 = vunpack.c.l.b16 %v1781
          %v1824 = vunpack.c.l.b16 %v1782
          %v1825 = vunpack.c.h.b16 %v1781
          %v1826 = vunpack.c.h.b16 %v1782
          %v1827 = vunpack.c.l.b16 %v1783
          %v1828 = vunpack.c.l.b16 %v1784
          %v1829 = vunpack.c.h.b16 %v1783
          %v1830 = vunpack.c.h.b16 %v1784
          %v1831 = vunpack.c.l.b16 %v1785
          %v1832 = vunpack.c.l.b16 %v1786
          %v1833 = vunpack.c.h.b16 %v1785
          %v1834 = vunpack.c.h.b16 %v1786
          %v1835 = vpack.c.b16 %v1804, %v1803
          %v1836 = vpack.c.b16 %v1806, %v1805
          %v1837 = vpack.c.b16 %v1808, %v1807
          %v1838 = vpack.c.b16 %v1810, %v1809
          %v1839 = vpack.c.b16 %v1812, %v1811
          %v1840 = vpack.c.b16 %v1814, %v1813
          %v1841 = vpack.c.b16 %v1816, %v1815
          %v1842 = vpack.c.b16 %v1818, %v1817
          %v1843 = vpack.c.b16 %v1820, %v1819
          %v1844 = vpack.c.b16 %v1822, %v1821
          %v1845 = vpack.c.b16 %v1824, %v1823
          %v1846 = vpack.c.b16 %v1826, %v1825
          %v1847 = vpack.c.b16 %v1828, %v1827
          %v1848 = vpack.c.b16 %v1830, %v1829
          %v1849 = vpack.c.b16 %v1832, %v1831
          %v1850 = vpack.c.b16 %v1834, %v1833
          %1867 = vst [vmem:[%s346] sm:$0xff] %v1835
          %1868 = vst [vmem:[%s346 + $0x8] sm:$0xff] %v1836
          %1869 = vst [vmem:[%s346 + $0x10] sm:$0xff] %v1837
          %1870 = vst [vmem:[%s346 + $0x18] sm:$0xff] %v1838
          %1871 = vst [vmem:[%s346 + $0x20] sm:$0xff] %v1839
          %1872 = vst [vmem:[%s346 + $0x28] sm:$0xff] %v1840
          %1873 = vst [vmem:[%s346 + $0x30] sm:$0xff] %v1841
          %1874 = vst [vmem:[%s346 + $0x38] sm:$0xff] %v1842
          %1875 = vst [vmem:[%s346 + $0x40] sm:$0xff] %v1843
          %1876 = vst [vmem:[%s346 + $0x48] sm:$0xff] %v1844
          %1877 = vst [vmem:[%s346 + $0x50] sm:$0xff] %v1845
          %1878 = vst [vmem:[%s346 + $0x58] sm:$0xff] %v1846
          %1879 = vst [vmem:[%s346 + $0x60] sm:$0xff] %v1847
          %1880 = vst [vmem:[%s346 + $0x68] sm:$0xff] %v1848
          %1881 = vst [vmem:[%s346 + $0x70] sm:$0xff] %v1849
          %1882 = vst [vmem:[%s346 + $0x78] sm:$0xff] %v1850
        $region60: #{tpu_custom_call.1} parent=35 // pred_fallthru
          _
        %s1883 = sand.u32 %s151, 1
        %s1884 = scalar_lea.sflag [#allocation5], %s1883
        %s1885 = sand.u32 %s151, 1
        %s1886 = smul.addr %s1885, 128
        %s1887 = scalar_lea.vmem [#allocation11], %s1886
        // Predicated region
        $region61: #{tpu_custom_call.1} parent=35 // pred_check
          %p1888 = pneg %p161
        $region62: #{tpu_custom_call.1} parent=35 // pred_check_branch
          %1890 = sbr.rel (%p1888) target = $region64
        $region63: #{tpu_custom_call.1} parent=35 // pred_region
          %s1891 = smul.u32 16, %s31
          %s1893 = ssub.s32 2048, 2048
          %1894 = vsyncadd %s1884, %s1893
          %s1895 = smul.addr %s1891, 2
          %s1896 = smul.addr %s1895, 64
          %s1897 = scalar_lea.hbm %s4, %s1896
          %s1898 = sshll.u32 %s1887, 4
          %s1899 = int_to_ptr.vmem [resolvable:$true] %s1898
          %1904 = dma.vmem_to_hbm [thread:$0]  %s1899, 2048, %s1897, %s1884, 128, 128, 8
        $region64: #{tpu_custom_call.1} parent=35 // pred_fallthru
          _
      $region36: #{tpu_custom_call.1} parent=5 // pred_fallthru
        _
      %p1905 = scmp.le.s32.totalorder 2, %s22
      // Predicated region
      $region65: #{tpu_custom_call.1} parent=5 // pred_check
        %p1906 = pneg %p1905
      $region66: #{tpu_custom_call.1} parent=5 // pred_check_branch
        %1908 = sbr.rel (%p1906) target = $region68
      $region67: #{tpu_custom_call.1} parent=5 // pred_region
        %s1909 = ssub.s32 %s22, 2
        // Predicated region
        $region69: #{tpu_custom_call.1} parent=67 // pred_check
          %p1910 = pneg %p167
        $region70: #{tpu_custom_call.1} parent=67 // pred_check_branch
          %1912 = sbr.rel (%p1910) target = $region72
        $region71: #{tpu_custom_call.1} parent=67 // pred_region
          %s1913 = sand.u32 %s152, 1
          %s1914 = scalar_lea.sflag [#allocation5], %s1913
          %s1915 = sand.u32 %s152, 1
          %s1916 = smul.addr %s1915, 128
          %s1917 = scalar_lea.vmem [#allocation11], %s1916
          %1918 = dma.done %s1914, 2048
        $region72: #{tpu_custom_call.1} parent=67 // pred_fallthru
          _
      $region68: #{tpu_custom_call.1} parent=5 // pred_fallthru
        _
    $region6: #{tpu_custom_call.1} parent=1 // loop_footer
      %s26 = sadd.s32 1, %s22
    $region7: #{tpu_custom_call.1} parent=1 // loop_footer_branch
      %21 = sbr.rel target = $region3
    $region8: #{tpu_custom_call.1} parent=1 // loop_exit
      _
    %1919 = vsyncpa [#allocation4], 1
    %s1920 = scalar_lea.sflag [#allocation4], 1
    %1921 = vsyncpa %s1920, 1
    %1922 = vsyncpa [#allocation7], 1
    %s1923 = scalar_lea.sflag [#allocation7], 1
    %1924 = vsyncpa %s1923, 1
    %1925 = vsyncpa [#allocation10], 1
    %s1926 = scalar_lea.sflag [#allocation10], 1
    %1927 = vsyncpa %s1926, 1
    %1928 = vsyncpa [#allocation5], 1
    %s1929 = scalar_lea.sflag [#allocation5], 1
    %1930 = vsyncpa %s1929, 1

</llo_original>
